<compile_context>
chip_gen: v7x
topology: tpu7x:2x2x1
jax: 0.10.0
libtpu: 0.0.40
codegen_flags: <defaults>
</compile_context>

<pallas_src>
import functools
import math

import jax
import jax.numpy as jnp
from jax.experimental import pallas as pl
from jax.experimental.pallas import tpu as pltpu

_LANES = 128


def _round_up(x, m):
    return ((x + m - 1) // m) * m


def _fusion_kernel(drug_ref, cell_ref, w1a_ref, w1b_ref, b1_ref,
                   w2_ref, b2_ref, w3_ref, b3_ref, packed_ref, *, out_col):
    # fc1: concat(drug, cell) @ W1 == drug @ W1[:Dd] + cell @ W1[Dd:]
    drug = drug_ref[...].astype(jnp.bfloat16)
    cell = cell_ref[...].astype(jnp.bfloat16)
    h1 = jnp.dot(drug, w1a_ref[...], preferred_element_type=jnp.float32)
    h1 = h1 + jnp.dot(cell, w1b_ref[...], preferred_element_type=jnp.float32)
    h1 = jnp.maximum(h1 + b1_ref[...], 0.0)          # ReLU (dropout = identity)

    # fc2 -> x_feature; N is zero-padded to 128 lanes (padding columns stay 0).
    feat = jnp.dot(h1.astype(jnp.bfloat16), w2_ref[...],
                   preferred_element_type=jnp.float32) + b2_ref[...]

    # fc3 has a single output column: keep it off the MXU (VPU mul + XLU reduce).
    h2 = jnp.maximum(feat, 0.0)
    logits = jnp.sum(h2 * w3_ref[...], axis=-1, keepdims=True) + b3_ref[0]
    sig = 0.5 * (jnp.tanh(0.5 * logits) + 1.0)        # exact sigmoid via EUP tanh

    # Single lane-dense 128-wide store: [feat | sigmoid | zeros] packed.
    lane = jax.lax.broadcasted_iota(jnp.int32, feat.shape, 1)
    packed_ref[...] = jnp.where(lane == out_col, sig, feat).astype(packed_ref.dtype)


def fusion_forward(drug, cell, params, *, tb=512):
    """Full Fusion MLP in one batch-tiled Pallas kernel.

    drug: [B, D_drug] f32, cell: [B, D_cell] f32.
    Returns (out [B, 1], x_feature [B, fc_2_dim]) in f32.
    """
    B, d_drug = drug.shape
    _, d_cell = cell.shape
    H1 = params["w1"].shape[1]
    H2 = params["w2"].shape[1]
    H3 = params["w3"].shape[1]
    # TODO(synk): the VPU fc3 path assumes a single regression column; a general
    # fc_3_dim would use a third (padded) MXU matmul instead.
    assert H3 == 1, "fusion_forward currently supports fc_3_dim == 1 only"

    # Pad fc2's output lanes to 128 and leave at least one spare column for the
    # sigmoid output so both can share one lane-dense output slab.
    H2p = _round_up(H2 + 1, _LANES)
    out_col = H2

    # --- parameter prep (one-time, wrapper side) ---
    w1 = params["w1"].astype(jnp.bfloat16)
    w1a, w1b = w1[:d_drug], w1[d_drug:]
    b1 = params["b1"].reshape(1, H1).astype(jnp.float32)
    w2p = jnp.zeros((H1, H2p), jnp.bfloat16).at[:, :H2].set(
        params["w2"].astype(jnp.bfloat16))
    b2p = jnp.zeros((1, H2p), jnp.float32).at[:, :H2].set(
        params["b2"].reshape(1, H2).astype(jnp.float32))
    w3row = jnp.zeros((1, H2p), jnp.float32).at[:, :H2].set(
        params["w3"].reshape(1, H2).astype(jnp.float32))
    b3 = params["b3"].reshape(1).astype(jnp.float32)

    # --- batch tiling ---
    tb = _round_up(min(tb, _round_up(B, 8)), 8)
    nb = pl.cdiv(B, tb)
    Bp = nb * tb
    if Bp != B:
        drug = jnp.pad(drug, ((0, Bp - B), (0, 0)))
        cell = jnp.pad(cell, ((0, Bp - B), (0, 0)))

    batch_spec = lambda a: pl.BlockSpec((tb, a.shape[1]), lambda i: (i, 0))
    resident = lambda a: pl.BlockSpec(a.shape, lambda i: (0, 0))
    in_specs = [
        batch_spec(drug), batch_spec(cell),
        resident(w1a), resident(w1b), resident(b1),
        resident(w2p), resident(b2p), resident(w3row),
        pl.BlockSpec(memory_space=pltpu.MemorySpace.SMEM),   # b3 scalar
    ]
    out_spec = pl.BlockSpec((tb, H2p), lambda i: (i, 0))

    flops = 2 * Bp * ((d_drug + d_cell) * H1 + H1 * H2p) + 4 * Bp * H2p
    bytes_accessed = (drug.nbytes + cell.nbytes + Bp * H2p * 4 +
                      w1a.nbytes + w1b.nbytes + w2p.nbytes +
                      b1.nbytes + b2p.nbytes + w3row.nbytes + b3.nbytes)

    packed = pl.pallas_call(
        functools.partial(_fusion_kernel, out_col=out_col),
        out_shape=jax.ShapeDtypeStruct((Bp, H2p), jnp.float32),
        grid=(nb,),
        in_specs=in_specs,
        out_specs=out_spec,
        compiler_params=pltpu.CompilerParams(
            dimension_semantics=("parallel",),
            vmem_limit_bytes=32 << 20,
        ),
        cost_estimate=pl.CostEstimate(
            flops=flops, transcendentals=Bp, bytes_accessed=bytes_accessed),
    )(drug, cell, w1a, w1b, b1, w2p, b2p, w3row, b3)

    feat = packed[:B, :H2]
    out = packed[:B, out_col:out_col + 1]
    return out, feat


def init_params(key, drug_dim, cell_dim, fc_1_dim, fc_2_dim, fc_3_dim):
    """PyTorch nn.Linear-style init (uniform +/- 1/sqrt(fan_in)); weights are [in, out]."""
    input_dim = drug_dim + cell_dim
    ks = jax.random.split(key, 6)

    def linear(kw, kb, fan_in, fan_out):
        bound = 1.0 / math.sqrt(fan_in)
        w = jax.random.uniform(kw, (fan_in, fan_out), jnp.float32, -bound, bound)
        b = jax.random.uniform(kb, (1, fan_out), jnp.float32, -bound, bound)
        return w, b

    w1, b1 = linear(ks[0], ks[1], input_dim, fc_1_dim)
    w2, b2 = linear(ks[2], ks[3], fc_1_dim, fc_2_dim)
    w3, b3 = linear(ks[4], ks[5], fc_2_dim, fc_3_dim)
    return {"w1": w1, "b1": b1, "w2": w2, "b2": b2, "w3": w3, "b3": b3}


def _reference(drug, cell, p):
    x = jnp.concatenate([drug, cell], axis=1)
    h1 = jnp.maximum(x @ p["w1"] + p["b1"], 0.0)
    feat = h1 @ p["w2"] + p["b2"]
    h2 = jnp.maximum(feat, 0.0)
    out = jax.nn.sigmoid(h2 @ p["w3"] + p["b3"])
    return out, feat


if __name__ == "__main__":
    # Shapes consistent with the module's forward (regression head, fc_3_dim=1).
    B, DRUG_DIM, CELL_DIM = 1024, 32, 32
    FC1, FC2, FC3 = 64, 32, 1

    key = jax.random.PRNGKey(0)
    k_drug, k_cell, k_params = jax.random.split(key, 3)
    drug = jax.random.normal(k_drug, (B, DRUG_DIM), jnp.float32)
    cell = jax.random.normal(k_cell, (B, CELL_DIM), jnp.float32)

    # TODO(synk): dropout is treated as identity (inference mode); add
    # pltpu.prng_random_bits-based masking if training-mode dropout is needed.
    params = init_params(k_params, DRUG_DIM, CELL_DIM, FC1, FC2, FC3)

    out, feat = fusion_forward(drug, cell, params, tb=256)
    jax.block_until_ready((out, feat))

    # Numerical check against a pure-f32 JAX reference (bf16 MXU => loose tol).
    ref_out, ref_feat = _reference(drug, cell, params)
    assert out.shape == (B, FC3) and feat.shape == (B, FC2)
    assert jnp.allclose(feat, ref_feat, atol=5e-2, rtol=5e-2)
    assert jnp.allclose(out, ref_out, atol=2e-2, rtol=2e-2)

    print("KERNEL_OK")
</pallas_src>

<mosaic_0001>
module attributes {stable_mosaic.version = 11 : i64} {
  func.func @_fusion_kernel(%arg0: i32, %arg1: memref<256x32xf32, #tpu.memory_space<vmem>>, %arg2: memref<256x32xf32, #tpu.memory_space<vmem>>, %arg3: memref<32x64xbf16, #tpu.memory_space<vmem>>, %arg4: memref<32x64xbf16, #tpu.memory_space<vmem>>, %arg5: memref<1x64xf32, #tpu.memory_space<vmem>>, %arg6: memref<64x128xbf16, #tpu.memory_space<vmem>>, %arg7: memref<1x128xf32, #tpu.memory_space<vmem>>, %arg8: memref<1x128xf32, #tpu.memory_space<vmem>>, %arg9: memref<1xf32, #tpu.memory_space<smem>>, %arg10: memref<256x128xf32, #tpu.memory_space<vmem>>) attributes {dimension_semantics = [#tpu.dimension_semantics<parallel>], iteration_bounds = array<i64: 4>, scalar_prefetch = 0 : i64, scratch_operands = 0 : i64, tpu.core_type = #tpu.core_type<tc>, window_params = [{transform_indices = @transform_0, window_bounds = array<i64: 256, 32>}, {transform_indices = @transform_1, window_bounds = array<i64: 256, 32>}, {pipeline_mode = #tpu.pipeline_mode<synchronous>, transform_indices = @transform_2, window_bounds = array<i64: 32, 64>}, {pipeline_mode = #tpu.pipeline_mode<synchronous>, transform_indices = @transform_3, window_bounds = array<i64: 32, 64>}, {pipeline_mode = #tpu.pipeline_mode<synchronous>, transform_indices = @transform_4, window_bounds = array<i64: 1, 64>}, {pipeline_mode = #tpu.pipeline_mode<synchronous>, transform_indices = @transform_5, window_bounds = array<i64: 64, 128>}, {pipeline_mode = #tpu.pipeline_mode<synchronous>, transform_indices = @transform_6, window_bounds = array<i64: 1, 128>}, {pipeline_mode = #tpu.pipeline_mode<synchronous>, transform_indices = @transform_7, window_bounds = array<i64: 1, 128>}, {transform_indices = @transform_8, window_bounds = array<i64: 1>}, {transform_indices = @transform_9, window_bounds = array<i64: 256, 128>}]} {
    %c0 = arith.constant 0 : index
    %c0_0 = arith.constant 0 : index
    %0 = vector.load %arg1[%c0, %c0_0] : memref<256x32xf32, #tpu.memory_space<vmem>>, vector<256x32xf32>
    %1 = arith.truncf %0 : vector<256x32xf32> to vector<256x32xbf16>
    %c0_1 = arith.constant 0 : index
    %c0_2 = arith.constant 0 : index
    %2 = vector.load %arg2[%c0_1, %c0_2] : memref<256x32xf32, #tpu.memory_space<vmem>>, vector<256x32xf32>
    %3 = arith.truncf %2 : vector<256x32xf32> to vector<256x32xbf16>
    %c0_3 = arith.constant 0 : index
    %c0_4 = arith.constant 0 : index
    %4 = vector.load %arg3[%c0_3, %c0_4] : memref<32x64xbf16, #tpu.memory_space<vmem>>, vector<32x64xbf16>
    %cst = arith.constant dense<0.000000e+00> : vector<256x64xf32>
    %5 = tpu.matmul %1, %4, %cst {dimension_numbers = #tpu.dot_dimension_numbers<[1], [0], [0], [1], [0, 0, 1, 1], [], []>} : vector<256x32xbf16>, vector<32x64xbf16>, vector<256x64xf32> -> vector<256x64xf32>
    %c0_5 = arith.constant 0 : index
    %c0_6 = arith.constant 0 : index
    %6 = vector.load %arg4[%c0_5, %c0_6] : memref<32x64xbf16, #tpu.memory_space<vmem>>, vector<32x64xbf16>
    %cst_7 = arith.constant dense<0.000000e+00> : vector<256x64xf32>
    %7 = tpu.matmul %3, %6, %cst_7 {dimension_numbers = #tpu.dot_dimension_numbers<[1], [0], [0], [1], [0, 0, 1, 1], [], []>} : vector<256x32xbf16>, vector<32x64xbf16>, vector<256x64xf32> -> vector<256x64xf32>
    %8 = arith.addf %5, %7 : vector<256x64xf32>
    %c0_8 = arith.constant 0 : index
    %c0_9 = arith.constant 0 : index
    %9 = vector.load %arg5[%c0_8, %c0_9] : memref<1x64xf32, #tpu.memory_space<vmem>>, vector<1x64xf32>
    %10 = vector.broadcast %9 : vector<1x64xf32> to vector<256x64xf32>
    %11 = arith.addf %8, %10 : vector<256x64xf32>
    %cst_10 = arith.constant 0.000000e+00 : f32
    %12 = vector.broadcast %cst_10 : f32 to vector<256x64xf32>
    %13 = arith.maximumf %11, %12 : vector<256x64xf32>
    %14 = arith.truncf %13 : vector<256x64xf32> to vector<256x64xbf16>
    %c0_11 = arith.constant 0 : index
    %c0_12 = arith.constant 0 : index
    %15 = vector.load %arg6[%c0_11, %c0_12] : memref<64x128xbf16, #tpu.memory_space<vmem>>, vector<64x128xbf16>
    %cst_13 = arith.constant dense<0.000000e+00> : vector<256x128xf32>
    %16 = tpu.matmul %14, %15, %cst_13 {dimension_numbers = #tpu.dot_dimension_numbers<[1], [0], [0], [1], [0, 0, 1, 1], [], []>} : vector<256x64xbf16>, vector<64x128xbf16>, vector<256x128xf32> -> vector<256x128xf32>
    %c0_14 = arith.constant 0 : index
    %c0_15 = arith.constant 0 : index
    %17 = vector.load %arg7[%c0_14, %c0_15] : memref<1x128xf32, #tpu.memory_space<vmem>>, vector<1x128xf32>
    %18 = vector.broadcast %17 : vector<1x128xf32> to vector<256x128xf32>
    %19 = arith.addf %16, %18 : vector<256x128xf32>
    %cst_16 = arith.constant 0.000000e+00 : f32
    %20 = vector.broadcast %cst_16 : f32 to vector<256x128xf32>
    %21 = arith.maximumf %19, %20 : vector<256x128xf32>
    %c0_17 = arith.constant 0 : index
    %c0_18 = arith.constant 0 : index
    %22 = vector.load %arg8[%c0_17, %c0_18] : memref<1x128xf32, #tpu.memory_space<vmem>>, vector<1x128xf32>
    %23 = vector.broadcast %22 : vector<1x128xf32> to vector<256x128xf32>
    %24 = arith.mulf %21, %23 : vector<256x128xf32>
    %cst_19 = arith.constant dense<0.000000e+00> : vector<256xf32>
    %25 = vector.multi_reduction <add>, %24, %cst_19 [1] : vector<256x128xf32> to vector<256xf32>
    %26 = vector.shape_cast %25 : vector<256xf32> to vector<256x1xf32>
    %c0_20 = arith.constant 0 : index
    %27 = memref.load %arg9[%c0_20] : memref<1xf32, #tpu.memory_space<smem>>
    %28 = vector.broadcast %27 : f32 to vector<256x1xf32>
    %29 = arith.addf %26, %28 : vector<256x1xf32>
    %cst_21 = arith.constant 5.000000e-01 : f32
    %30 = vector.broadcast %cst_21 : f32 to vector<256x1xf32>
    %31 = arith.mulf %30, %29 : vector<256x1xf32>
    %32 = math.tanh %31 : vector<256x1xf32>
    %cst_22 = arith.constant 1.000000e+00 : f32
    %33 = vector.broadcast %cst_22 : f32 to vector<256x1xf32>
    %34 = arith.addf %32, %33 : vector<256x1xf32>
    %cst_23 = arith.constant 5.000000e-01 : f32
    %35 = vector.broadcast %cst_23 : f32 to vector<256x1xf32>
    %36 = arith.mulf %35, %34 : vector<256x1xf32>
    %37 = tpu.iota {dimensions = array<i32: 1>} : vector<256x128xi32>
    %c32_i32 = arith.constant 32 : i32
    %38 = vector.broadcast %c32_i32 : i32 to vector<256x128xi32>
    %39 = arith.cmpi eq, %37, %38 : vector<256x128xi32>
    %40 = vector.shape_cast %36 : vector<256x1xf32> to vector<256x1xf32>
    %41 = vector.broadcast %40 : vector<256x1xf32> to vector<256x128xf32>
    %42 = arith.select %39, %41, %19 : vector<256x128xi1>, vector<256x128xf32>
    %c0_24 = arith.constant 0 : index
    %c0_25 = arith.constant 0 : index
    %43 = vector.load %arg10[%c0_24, %c0_25] : memref<256x128xf32, #tpu.memory_space<vmem>>, vector<256x128xf32>
    tpu.vector_store %arg10[%c0_24, %c0_25], %42 {strides = array<i32>} : memref<256x128xf32, #tpu.memory_space<vmem>>, vector<256x128xf32>,
    return
  }
  func.func @transform_0(%arg0: i32) -> (i32, i32) {
    %c0_i32 = arith.constant 0 : i32
    %c0_i32_0 = arith.constant 0 : i32
    return %arg0, %c0_i32 : i32, i32
  }
  func.func @transform_1(%arg0: i32) -> (i32, i32) {
    %c0_i32 = arith.constant 0 : i32
    %c0_i32_0 = arith.constant 0 : i32
    return %arg0, %c0_i32 : i32, i32
  }
  func.func @transform_2(%arg0: i32) -> (i32, i32) {
    %c0_i32 = arith.constant 0 : i32
    %c0_i32_0 = arith.constant 0 : i32
    %c0_i32_1 = arith.constant 0 : i32
    return %c0_i32, %c0_i32_0 : i32, i32
  }
  func.func @transform_3(%arg0: i32) -> (i32, i32) {
    %c0_i32 = arith.constant 0 : i32
    %c0_i32_0 = arith.constant 0 : i32
    %c0_i32_1 = arith.constant 0 : i32
    return %c0_i32, %c0_i32_0 : i32, i32
  }
  func.func @transform_4(%arg0: i32) -> (i32, i32) {
    %c0_i32 = arith.constant 0 : i32
    %c0_i32_0 = arith.constant 0 : i32
    %c0_i32_1 = arith.constant 0 : i32
    return %c0_i32, %c0_i32_0 : i32, i32
  }
  func.func @transform_5(%arg0: i32) -> (i32, i32) {
    %c0_i32 = arith.constant 0 : i32
    %c0_i32_0 = arith.constant 0 : i32
    %c0_i32_1 = arith.constant 0 : i32
    return %c0_i32, %c0_i32_0 : i32, i32
  }
  func.func @transform_6(%arg0: i32) -> (i32, i32) {
    %c0_i32 = arith.constant 0 : i32
    %c0_i32_0 = arith.constant 0 : i32
    %c0_i32_1 = arith.constant 0 : i32
    return %c0_i32, %c0_i32_0 : i32, i32
  }
  func.func @transform_7(%arg0: i32) -> (i32, i32) {
    %c0_i32 = arith.constant 0 : i32
    %c0_i32_0 = arith.constant 0 : i32
    %c0_i32_1 = arith.constant 0 : i32
    return %c0_i32, %c0_i32_0 : i32, i32
  }
  func.func @transform_8(%arg0: i32) -> i32 {
    %c0_i32 = arith.constant 0 : i32
    %c0_i32_0 = arith.constant 0 : i32
    return %c0_i32 : i32
  }
  func.func @transform_9(%arg0: i32) -> (i32, i32) {
    %c0_i32 = arith.constant 0 : i32
    %c0_i32_0 = arith.constant 0 : i32
    return %arg0, %c0_i32 : i32, i32
  }
}

</mosaic_0001>

<llo_original>
// kernel: tpu_custom_call.1
$region0: #{tpu_custom_call.1}
  #allocation0 [shape = 'u32[]', space=smem, size = 0x4, offset = 0x4, fixed_abs, tag = 'smem constant byte address 0x4 - core index']
  #allocation1 [shape = 'u32[144,128]{1,0:T(1,128)}', space=vmem, size = 0x12000, scoped, tag = 'internal scratch']
  #allocation2 [shape = 'f32[1]{0:T(128)S(6)}', space=smem, size = 0x200, scoped, tag = 'scoped memory for tpu_custom_call.1']
  %s0 = inlined_call_operand.vmem [shape: f32[1024,32], index: 0, kind: input, shape index: {}]
  %s1 = inlined_call_operand.vmem [shape: f32[1024,32], index: 1, kind: input, shape index: {}]
  %s2 = inlined_call_operand.vmem [shape: bf16[32,64], index: 2, kind: input, shape index: {}]
  %s3 = inlined_call_operand.vmem [shape: bf16[32,64], index: 3, kind: input, shape index: {}]
  %s4 = inlined_call_operand.vmem [shape: f32[1,64], index: 4, kind: input, shape index: {}]
  %s5 = inlined_call_operand.vmem [shape: bf16[64,128], index: 5, kind: input, shape index: {}]
  %s6 = inlined_call_operand.vmem [shape: f32[1,128], index: 6, kind: input, shape index: {}]
  %s7 = inlined_call_operand.vmem [shape: f32[1,128], index: 7, kind: input, shape index: {}]
  %s8 = inlined_call_operand.<no memory space> [shape: f32[1], index: 8, kind: input, shape index: {}]
  %s9 = inlined_call_operand.hbm [shape: f32[1024,128], index: 9, kind: output, shape index: {}]
  %s10 = sld [smem:[#allocation0]]
  $region69: #{tpu_custom_call.1} parent=0
    _
  %s12 = ssub.s32 1, %s10
  %s13 = scalar_select 0, %s12, %s10
  %14 = sst [smem:[#allocation2]] %s8
  $region1: #{tpu_custom_call.1} parent=0
    #allocation3 [shape = 'u8[262144]{0}', space=vmem, size = 0x40000, scoped, tag = 'output window, operand 0']
    #allocation4 [shape = 's32[2]{0}', space=sflag, size = 0x8, scoped, tag = 'scoped memory for tpu_custom_call.1']
    %15 = vsyncpa [#allocation4], 0
    %s16 = scalar_lea.sflag [#allocation4], 1
    %17 = vsyncpa %s16, 0
    loop: start=0, step=1, limit=6
    $region2: #{tpu_custom_call.1} parent=1 // loop_pre_header
      _
    $region3: #{tpu_custom_call.1} parent=1 // loop_header
      %s19 = sphi 0, %s23
      %p20 = scmp.ge.s32.totalorder %s19, 6
      %s29 = sphi 0, %s31
      %s32 = sphi 0, %s29
      %s33 = sphi 0, %s32
      %s49 = sphi 0, %s33
      %s55 = sphi 0, %s57
      %s58 = sphi 0, %s55
      %s59 = sphi 0, %s58
      %s75 = sphi 0, %s59
      %s79 = sphi 0, %s79
      %s81 = sphi 0, %s79
      %s82 = sphi 0, %s81
      %s96 = sphi 0, %s82
      %s100 = sphi 0, %s100
      %s102 = sphi 0, %s100
      %s103 = sphi 0, %s102
      %s117 = sphi 0, %s103
      %s121 = sphi 0, %s121
      %s123 = sphi 0, %s121
      %s124 = sphi 0, %s123
      %s138 = sphi 0, %s124
      %s142 = sphi 0, %s142
      %s144 = sphi 0, %s142
      %s145 = sphi 0, %s144
      %s159 = sphi 0, %s145
      %s163 = sphi 0, %s163
      %s165 = sphi 0, %s163
      %s166 = sphi 0, %s165
      %s180 = sphi 0, %s166
      %s184 = sphi 0, %s184
      %s186 = sphi 0, %s184
      %s187 = sphi 0, %s186
      %s201 = sphi 0, %s187
      %s205 = sphi 0, %s205
      %s207 = sphi 0, %s205
      %s208 = sphi 0, %s207
      %s222 = sphi 0, %s208
      %s228 = sphi 0, %s230
      %s231 = sphi 0, %s228
      %s232 = sphi 0, %s231
      %s248 = sphi 0, %s232
    $region4: #{tpu_custom_call.1} parent=1 // loop_header_branch
      %22 = sbr.rel (%p20) target = $region8
    $region5: #{tpu_custom_call.1} parent=1 // loop_body
      %s24 = ssub.s32 %s19, 1
      %s25 = ssub.s32 %s19, 2
      %s26 = sadd.s32 %s19, 1
      %s27 = ssub.s32 %s19, %s26
      %p28 = scmp.eq.s32.totalorder %s27, 0
      %s30 = sadd.s32 %s29, 1
      %s31 = scalar_select %p28, %s29, %s30
      %p34 = pneg %p28
      %p35 = scmp.eq.s32.totalorder %s19, 3
      %p36 = por %p34, %p35
      %p37 = scmp.ne.s32.totalorder %s29, %s32
      %p38 = scmp.eq.s32.totalorder %s19, 0
      %p39 = por %p37, %p38
      %p40 = scmp.ne.s32.totalorder %s29, %s32
      %p41 = scmp.eq.s32.totalorder %s24, 3
      %p42 = por %p40, %p41
      %p43 = scmp.ne.s32.totalorder %s32, %s33
      %p44 = scmp.eq.s32.totalorder %s24, 0
      %p45 = por %p43, %p44
      %p46 = scmp.ne.s32.totalorder %s32, %s33
      %p47 = scmp.eq.s32.totalorder %s25, 3
      %p48 = por %p46, %p47
      %p50 = scmp.ne.s32.totalorder %s33, %s49
      %p51 = scmp.eq.s32.totalorder %s25, 0
      %p52 = por %p50, %p51
      %s53 = ssub.s32 %s19, %s26
      %p54 = scmp.eq.s32.totalorder %s53, 0
      %s56 = sadd.s32 %s55, 1
      %s57 = scalar_select %p54, %s55, %s56
      %p60 = pneg %p54
      %p61 = scmp.eq.s32.totalorder %s19, 3
      %p62 = por %p60, %p61
      %p63 = scmp.ne.s32.totalorder %s55, %s58
      %p64 = scmp.eq.s32.totalorder %s19, 0
      %p65 = por %p63, %p64
      %p66 = scmp.ne.s32.totalorder %s55, %s58
      %p67 = scmp.eq.s32.totalorder %s24, 3
      %p68 = por %p66, %p67
      %p69 = scmp.ne.s32.totalorder %s58, %s59
      %p70 = scmp.eq.s32.totalorder %s24, 0
      %p71 = por %p69, %p70
      %p72 = scmp.ne.s32.totalorder %s58, %s59
      %p73 = scmp.eq.s32.totalorder %s25, 3
      %p74 = por %p72, %p73
      %p76 = scmp.ne.s32.totalorder %s59, %s75
      %p77 = scmp.eq.s32.totalorder %s25, 0
      %p78 = por %p76, %p77
      %s80 = sadd.s32 %s79, 1
      %p83 = scmp.eq.s32.totalorder %s19, 3
      %p84 = scmp.ne.s32.totalorder %s79, %s81
      %p85 = scmp.eq.s32.totalorder %s19, 0
      %p86 = por %p84, %p85
      %p87 = scmp.ne.s32.totalorder %s79, %s81
      %p88 = scmp.eq.s32.totalorder %s24, 3
      %p89 = por %p87, %p88
      %p90 = scmp.ne.s32.totalorder %s81, %s82
      %p91 = scmp.eq.s32.totalorder %s24, 0
      %p92 = por %p90, %p91
      %p93 = scmp.ne.s32.totalorder %s81, %s82
      %p94 = scmp.eq.s32.totalorder %s25, 3
      %p95 = por %p93, %p94
      %p97 = scmp.ne.s32.totalorder %s82, %s96
      %p98 = scmp.eq.s32.totalorder %s25, 0
      %p99 = por %p97, %p98
      %s101 = sadd.s32 %s100, 1
      %p104 = scmp.eq.s32.totalorder %s19, 3
      %p105 = scmp.ne.s32.totalorder %s100, %s102
      %p106 = scmp.eq.s32.totalorder %s19, 0
      %p107 = por %p105, %p106
      %p108 = scmp.ne.s32.totalorder %s100, %s102
      %p109 = scmp.eq.s32.totalorder %s24, 3
      %p110 = por %p108, %p109
      %p111 = scmp.ne.s32.totalorder %s102, %s103
      %p112 = scmp.eq.s32.totalorder %s24, 0
      %p113 = por %p111, %p112
      %p114 = scmp.ne.s32.totalorder %s102, %s103
      %p115 = scmp.eq.s32.totalorder %s25, 3
      %p116 = por %p114, %p115
      %p118 = scmp.ne.s32.totalorder %s103, %s117
      %p119 = scmp.eq.s32.totalorder %s25, 0
      %p120 = por %p118, %p119
      %s122 = sadd.s32 %s121, 1
      %p125 = scmp.eq.s32.totalorder %s19, 3
      %p126 = scmp.ne.s32.totalorder %s121, %s123
      %p127 = scmp.eq.s32.totalorder %s19, 0
      %p128 = por %p126, %p127
      %p129 = scmp.ne.s32.totalorder %s121, %s123
      %p130 = scmp.eq.s32.totalorder %s24, 3
      %p131 = por %p129, %p130
      %p132 = scmp.ne.s32.totalorder %s123, %s124
      %p133 = scmp.eq.s32.totalorder %s24, 0
      %p134 = por %p132, %p133
      %p135 = scmp.ne.s32.totalorder %s123, %s124
      %p136 = scmp.eq.s32.totalorder %s25, 3
      %p137 = por %p135, %p136
      %p139 = scmp.ne.s32.totalorder %s124, %s138
      %p140 = scmp.eq.s32.totalorder %s25, 0
      %p141 = por %p139, %p140
      %s143 = sadd.s32 %s142, 1
      %p146 = scmp.eq.s32.totalorder %s19, 3
      %p147 = scmp.ne.s32.totalorder %s142, %s144
      %p148 = scmp.eq.s32.totalorder %s19, 0
      %p149 = por %p147, %p148
      %p150 = scmp.ne.s32.totalorder %s142, %s144
      %p151 = scmp.eq.s32.totalorder %s24, 3
      %p152 = por %p150, %p151
      %p153 = scmp.ne.s32.totalorder %s144, %s145
      %p154 = scmp.eq.s32.totalorder %s24, 0
      %p155 = por %p153, %p154
      %p156 = scmp.ne.s32.totalorder %s144, %s145
      %p157 = scmp.eq.s32.totalorder %s25, 3
      %p158 = por %p156, %p157
      %p160 = scmp.ne.s32.totalorder %s145, %s159
      %p161 = scmp.eq.s32.totalorder %s25, 0
      %p162 = por %p160, %p161
      %s164 = sadd.s32 %s163, 1
      %p167 = scmp.eq.s32.totalorder %s19, 3
      %p168 = scmp.ne.s32.totalorder %s163, %s165
      %p169 = scmp.eq.s32.totalorder %s19, 0
      %p170 = por %p168, %p169
      %p171 = scmp.ne.s32.totalorder %s163, %s165
      %p172 = scmp.eq.s32.totalorder %s24, 3
      %p173 = por %p171, %p172
      %p174 = scmp.ne.s32.totalorder %s165, %s166
      %p175 = scmp.eq.s32.totalorder %s24, 0
      %p176 = por %p174, %p175
      %p177 = scmp.ne.s32.totalorder %s165, %s166
      %p178 = scmp.eq.s32.totalorder %s25, 3
      %p179 = por %p177, %p178
      %p181 = scmp.ne.s32.totalorder %s166, %s180
      %p182 = scmp.eq.s32.totalorder %s25, 0
      %p183 = por %p181, %p182
      %s185 = sadd.s32 %s184, 1
      %p188 = scmp.eq.s32.totalorder %s19, 3
      %p189 = scmp.ne.s32.totalorder %s184, %s186
      %p190 = scmp.eq.s32.totalorder %s19, 0
      %p191 = por %p189, %p190
      %p192 = scmp.ne.s32.totalorder %s184, %s186
      %p193 = scmp.eq.s32.totalorder %s24, 3
      %p194 = por %p192, %p193
      %p195 = scmp.ne.s32.totalorder %s186, %s187
      %p196 = scmp.eq.s32.totalorder %s24, 0
      %p197 = por %p195, %p196
      %p198 = scmp.ne.s32.totalorder %s186, %s187
      %p199 = scmp.eq.s32.totalorder %s25, 3
      %p200 = por %p198, %p199
      %p202 = scmp.ne.s32.totalorder %s187, %s201
      %p203 = scmp.eq.s32.totalorder %s25, 0
      %p204 = por %p202, %p203
      %s206 = sadd.s32 %s205, 1
      %p209 = scmp.eq.s32.totalorder %s19, 3
      %p210 = scmp.ne.s32.totalorder %s205, %s207
      %p211 = scmp.eq.s32.totalorder %s19, 0
      %p212 = por %p210, %p211
      %p213 = scmp.ne.s32.totalorder %s205, %s207
      %p214 = scmp.eq.s32.totalorder %s24, 3
      %p215 = por %p213, %p214
      %p216 = scmp.ne.s32.totalorder %s207, %s208
      %p217 = scmp.eq.s32.totalorder %s24, 0
      %p218 = por %p216, %p217
      %p219 = scmp.ne.s32.totalorder %s207, %s208
      %p220 = scmp.eq.s32.totalorder %s25, 3
      %p221 = por %p219, %p220
      %p223 = scmp.ne.s32.totalorder %s208, %s222
      %p224 = scmp.eq.s32.totalorder %s25, 0
      %p225 = por %p223, %p224
      %s226 = ssub.s32 %s19, %s26
      %p227 = scmp.eq.s32.totalorder %s226, 0
      %s229 = sadd.s32 %s228, 1
      %s230 = scalar_select %p227, %s228, %s229
      %p233 = pneg %p227
      %p234 = scmp.eq.s32.totalorder %s19, 3
      %p235 = por %p233, %p234
      %p236 = scmp.ne.s32.totalorder %s228, %s231
      %p237 = scmp.eq.s32.totalorder %s19, 0
      %p238 = por %p236, %p237
      %p239 = scmp.ne.s32.totalorder %s228, %s231
      %p240 = scmp.eq.s32.totalorder %s24, 3
      %p241 = por %p239, %p240
      %p242 = scmp.ne.s32.totalorder %s231, %s232
      %p243 = scmp.eq.s32.totalorder %s24, 0
      %p244 = por %p242, %p243
      %p245 = scmp.ne.s32.totalorder %s231, %s232
      %p246 = scmp.eq.s32.totalorder %s25, 3
      %p247 = por %p245, %p246
      %p249 = scmp.ne.s32.totalorder %s232, %s248
      %p250 = scmp.eq.s32.totalorder %s25, 0
      %p251 = por %p249, %p250
      %p252 = scmp.le.s32.totalorder 1, %s19
      %p253 = scmp.lt.s32.totalorder %s19, 5
      %p254 = pnand %p252, %p253
      %p255 = pneg %p254
      // Predicated region
      $region9: #{tpu_custom_call.1} parent=5 // pred_check
        _
      $region10: #{tpu_custom_call.1} parent=5 // pred_check_branch
        %257 = sbr.rel (%p254) target = $region12
      $region11: #{tpu_custom_call.1} parent=5 // pred_region
        %s258 = ssub.s32 %s19, 1
        // Predicated region
        $region13: #{tpu_custom_call.1} parent=11 // pred_check
          %p259 = pneg %p92
        $region14: #{tpu_custom_call.1} parent=11 // pred_check_branch
          %261 = sbr.rel (%p259) target = $region16
        $region15: #{tpu_custom_call.1} parent=11 // pred_region
          _
        $region16: #{tpu_custom_call.1} parent=11 // pred_fallthru
          _
        // Predicated region
        $region17: #{tpu_custom_call.1} parent=11 // pred_check
          %p262 = pneg %p113
        $region18: #{tpu_custom_call.1} parent=11 // pred_check_branch
          %264 = sbr.rel (%p262) target = $region20
        $region19: #{tpu_custom_call.1} parent=11 // pred_region
          _
        $region20: #{tpu_custom_call.1} parent=11 // pred_fallthru
          _
        // Predicated region
        $region21: #{tpu_custom_call.1} parent=11 // pred_check
          %p265 = pneg %p134
        $region22: #{tpu_custom_call.1} parent=11 // pred_check_branch
          %267 = sbr.rel (%p265) target = $region24
        $region23: #{tpu_custom_call.1} parent=11 // pred_region
          _
        $region24: #{tpu_custom_call.1} parent=11 // pred_fallthru
          _
        // Predicated region
        $region25: #{tpu_custom_call.1} parent=11 // pred_check
          %p268 = pneg %p155
        $region26: #{tpu_custom_call.1} parent=11 // pred_check_branch
          %270 = sbr.rel (%p268) target = $region28
        $region27: #{tpu_custom_call.1} parent=11 // pred_region
          _
        $region28: #{tpu_custom_call.1} parent=11 // pred_fallthru
          _
        // Predicated region
        $region29: #{tpu_custom_call.1} parent=11 // pred_check
          %p271 = pneg %p176
        $region30: #{tpu_custom_call.1} parent=11 // pred_check_branch
          %273 = sbr.rel (%p271) target = $region32
        $region31: #{tpu_custom_call.1} parent=11 // pred_region
          _
        $region32: #{tpu_custom_call.1} parent=11 // pred_fallthru
          _
        // Predicated region
        $region33: #{tpu_custom_call.1} parent=11 // pred_check
          %p274 = pneg %p197
        $region34: #{tpu_custom_call.1} parent=11 // pred_check_branch
          %276 = sbr.rel (%p274) target = $region36
        $region35: #{tpu_custom_call.1} parent=11 // pred_region
          _
        $region36: #{tpu_custom_call.1} parent=11 // pred_fallthru
          _
        // Predicated region
        $region37: #{tpu_custom_call.1} parent=11 // pred_check
          %p277 = pneg %p218
        $region38: #{tpu_custom_call.1} parent=11 // pred_check_branch
          %279 = sbr.rel (%p277) target = $region40
        $region39: #{tpu_custom_call.1} parent=11 // pred_region
          _
        $region40: #{tpu_custom_call.1} parent=11 // pred_fallthru
          _
      $region12: #{tpu_custom_call.1} parent=5 // pred_fallthru
        _
      %p280 = scmp.lt.s32.totalorder %s19, 4
      // Predicated region
      $region41: #{tpu_custom_call.1} parent=5 // pred_check
        %p281 = pneg %p280
      $region42: #{tpu_custom_call.1} parent=5 // pred_check_branch
        %283 = sbr.rel (%p281) target = $region44
      $region43: #{tpu_custom_call.1} parent=5 // pred_region
        // Predicated region
        $region45: #{tpu_custom_call.1} parent=43 // pred_check
          %p284 = pneg %p39
        $region46: #{tpu_custom_call.1} parent=43 // pred_check_branch
          %286 = sbr.rel (%p284) target = $region48
        $region47: #{tpu_custom_call.1} parent=43 // pred_region
          %s287 = smul.u32 32, %s19
          %p288 = scmp.lt.s32.totalorder %s287, 127
          %s289 = scalar_select %p288, %s287, 127
          %s290 = smul.addr %s289, 8
          %s291 = scalar_lea.vmem %s0, %s290
          %s292 = smul.u32 32, %s19
        $region48: #{tpu_custom_call.1} parent=43 // pred_fallthru
          _
        // Predicated region
        $region49: #{tpu_custom_call.1} parent=43 // pred_check
          %p293 = pneg %p65
        $region50: #{tpu_custom_call.1} parent=43 // pred_check_branch
          %295 = sbr.rel (%p293) target = $region52
        $region51: #{tpu_custom_call.1} parent=43 // pred_region
          %s296 = smul.u32 32, %s19
          %p297 = scmp.lt.s32.totalorder %s296, 127
          %s298 = scalar_select %p297, %s296, 127
          %s299 = smul.addr %s298, 8
          %s300 = scalar_lea.vmem %s1, %s299
          %s301 = smul.u32 32, %s19
        $region52: #{tpu_custom_call.1} parent=43 // pred_fallthru
          _
      $region44: #{tpu_custom_call.1} parent=5 // pred_fallthru
        _
      %p302 = scmp.le.s32.totalorder 1, %s19
      %p303 = scmp.lt.s32.totalorder %s19, 5
      %p304 = pnand %p302, %p303
      %p305 = pneg %p304
      // Predicated region
      $region53: #{tpu_custom_call.1} parent=5 // pred_check
        _
      $region54: #{tpu_custom_call.1} parent=5 // pred_check_branch
        %307 = sbr.rel (%p304) target = $region56
      $region55: #{tpu_custom_call.1} parent=5 // pred_region
        %s308 = ssub.s32 %s19, 1
        %s309 = smul.u32 32, %s24
        %p310 = scmp.lt.s32.totalorder %s309, 127
        %s311 = scalar_select %p310, %s309, 127
        %s312 = smul.addr %s311, 8
        %s313 = scalar_lea.vmem %s0, %s312
        %p314 = pneg %p45
        %p315 = pneg %p42
        %s316 = smul.u32 32, %s24
        %p317 = scmp.lt.s32.totalorder %s316, 127
        %s318 = scalar_select %p317, %s316, 127
        %s319 = smul.addr %s318, 8
        %s320 = scalar_lea.vmem %s1, %s319
        %p321 = pneg %p71
        %p322 = pneg %p68
        %p323 = pneg %p92
        %p324 = pneg %p89
        %p325 = pneg %p113
        %p326 = pneg %p110
        %p327 = pneg %p134
        %p328 = pneg %p131
        %p329 = pneg %p155
        %p330 = pneg %p152
        %p331 = pneg %p176
        %p332 = pneg %p173
        %p333 = pneg %p197
        %p334 = pneg %p194
        %p335 = pneg %p218
        %p336 = pneg %p215
        %p337 = pneg %p244
        %p338 = pneg %p241
        %s339 = sand.u32 %s231, 1
        %s340 = scalar_lea.sflag [#allocation4], %s339
        %s341 = sand.u32 %s231, 1
        %s342 = smul.addr %s341, 256
        %s343 = scalar_lea.vmem [#allocation3], %s342
        %s344 = smul.u32 32, %s24
        %p345 = scmp.lt.s32.totalorder %s344, 127
        %s346 = scalar_select %p345, %s344, 127
        %s347 = smul.addr %s346, 8
        %s348 = scalar_lea.vmem %s0, %s347
        %s349 = smul.u32 32, %s24
        %s350 = smul.u32 32, %s24
        %p351 = scmp.lt.s32.totalorder %s350, 127
        %s352 = scalar_select %p351, %s350, 127
        %s353 = smul.addr %s352, 8
        %s354 = scalar_lea.vmem %s1, %s353
        %s355 = smul.u32 32, %s24
        %s356 = smul.u32 32, %s24
        %v358 = vld [vmem:[%s348] sm:$0xff]
        %v359 = vld [vmem:[%s348 + $0x8] sm:$0xff]
        %v360 = vld [vmem:[%s348 + $0x10] sm:$0xff]
        %v361 = vld [vmem:[%s348 + $0x18] sm:$0xff]
        %v362 = vld [vmem:[%s348 + $0x20] sm:$0xff]
        %v363 = vld [vmem:[%s348 + $0x28] sm:$0xff]
        %v364 = vld [vmem:[%s348 + $0x30] sm:$0xff]
        %v365 = vld [vmem:[%s348 + $0x38] sm:$0xff]
        %v366 = vld [vmem:[%s348 + $0x40] sm:$0xff]
        %v367 = vld [vmem:[%s348 + $0x48] sm:$0xff]
        %v368 = vld [vmem:[%s348 + $0x50] sm:$0xff]
        %v369 = vld [vmem:[%s348 + $0x58] sm:$0xff]
        %v370 = vld [vmem:[%s348 + $0x60] sm:$0xff]
        %v371 = vld [vmem:[%s348 + $0x68] sm:$0xff]
        %v372 = vld [vmem:[%s348 + $0x70] sm:$0xff]
        %v373 = vld [vmem:[%s348 + $0x78] sm:$0xff]
        %v374 = vld [vmem:[%s348 + $0x80] sm:$0xff]
        %v375 = vld [vmem:[%s348 + $0x88] sm:$0xff]
        %v376 = vld [vmem:[%s348 + $0x90] sm:$0xff]
        %v377 = vld [vmem:[%s348 + $0x98] sm:$0xff]
        %v378 = vld [vmem:[%s348 + $0xa0] sm:$0xff]
        %v379 = vld [vmem:[%s348 + $0xa8] sm:$0xff]
        %v380 = vld [vmem:[%s348 + $0xb0] sm:$0xff]
        %v381 = vld [vmem:[%s348 + $0xb8] sm:$0xff]
        %v382 = vld [vmem:[%s348 + $0xc0] sm:$0xff]
        %v383 = vld [vmem:[%s348 + $0xc8] sm:$0xff]
        %v384 = vld [vmem:[%s348 + $0xd0] sm:$0xff]
        %v385 = vld [vmem:[%s348 + $0xd8] sm:$0xff]
        %v386 = vld [vmem:[%s348 + $0xe0] sm:$0xff]
        %v387 = vld [vmem:[%s348 + $0xe8] sm:$0xff]
        %v388 = vld [vmem:[%s348 + $0xf0] sm:$0xff]
        %v389 = vld [vmem:[%s348 + $0xf8] sm:$0xff]
        %v390 = vpack.c.bf16 %v359, %v358
        %v391 = vpack.c.bf16 %v361, %v360
        %v392 = vpack.c.bf16 %v363, %v362
        %v393 = vpack.c.bf16 %v365, %v364
        %v394 = vpack.c.bf16 %v367, %v366
        %v395 = vpack.c.bf16 %v369, %v368
        %v396 = vpack.c.bf16 %v371, %v370
        %v397 = vpack.c.bf16 %v373, %v372
        %v398 = vpack.c.bf16 %v375, %v374
        %v399 = vpack.c.bf16 %v377, %v376
        %v400 = vpack.c.bf16 %v379, %v378
        %v401 = vpack.c.bf16 %v381, %v380
        %v402 = vpack.c.bf16 %v383, %v382
        %v403 = vpack.c.bf16 %v385, %v384
        %v404 = vpack.c.bf16 %v387, %v386
        %v405 = vpack.c.bf16 %v389, %v388
        %v406 = vld [vmem:[%s354] sm:$0xff]
        %v407 = vld [vmem:[%s354 + $0x8] sm:$0xff]
        %v408 = vld [vmem:[%s354 + $0x10] sm:$0xff]
        %v409 = vld [vmem:[%s354 + $0x18] sm:$0xff]
        %v410 = vld [vmem:[%s354 + $0x20] sm:$0xff]
        %v411 = vld [vmem:[%s354 + $0x28] sm:$0xff]
        %v412 = vld [vmem:[%s354 + $0x30] sm:$0xff]
        %v413 = vld [vmem:[%s354 + $0x38] sm:$0xff]
        %v414 = vld [vmem:[%s354 + $0x40] sm:$0xff]
        %v415 = vld [vmem:[%s354 + $0x48] sm:$0xff]
        %v416 = vld [vmem:[%s354 + $0x50] sm:$0xff]
        %v417 = vld [vmem:[%s354 + $0x58] sm:$0xff]
        %v418 = vld [vmem:[%s354 + $0x60] sm:$0xff]
        %v419 = vld [vmem:[%s354 + $0x68] sm:$0xff]
        %v420 = vld [vmem:[%s354 + $0x70] sm:$0xff]
        %v421 = vld [vmem:[%s354 + $0x78] sm:$0xff]
        %v422 = vld [vmem:[%s354 + $0x80] sm:$0xff]
        %v423 = vld [vmem:[%s354 + $0x88] sm:$0xff]
        %v424 = vld [vmem:[%s354 + $0x90] sm:$0xff]
        %v425 = vld [vmem:[%s354 + $0x98] sm:$0xff]
        %v426 = vld [vmem:[%s354 + $0xa0] sm:$0xff]
        %v427 = vld [vmem:[%s354 + $0xa8] sm:$0xff]
        %v428 = vld [vmem:[%s354 + $0xb0] sm:$0xff]
        %v429 = vld [vmem:[%s354 + $0xb8] sm:$0xff]
        %v430 = vld [vmem:[%s354 + $0xc0] sm:$0xff]
        %v431 = vld [vmem:[%s354 + $0xc8] sm:$0xff]
        %v432 = vld [vmem:[%s354 + $0xd0] sm:$0xff]
        %v433 = vld [vmem:[%s354 + $0xd8] sm:$0xff]
        %v434 = vld [vmem:[%s354 + $0xe0] sm:$0xff]
        %v435 = vld [vmem:[%s354 + $0xe8] sm:$0xff]
        %v436 = vld [vmem:[%s354 + $0xf0] sm:$0xff]
        %v437 = vld [vmem:[%s354 + $0xf8] sm:$0xff]
        %v438 = vpack.c.bf16 %v407, %v406
        %v439 = vpack.c.bf16 %v409, %v408
        %v440 = vpack.c.bf16 %v411, %v410
        %v441 = vpack.c.bf16 %v413, %v412
        %v442 = vpack.c.bf16 %v415, %v414
        %v443 = vpack.c.bf16 %v417, %v416
        %v444 = vpack.c.bf16 %v419, %v418
        %v445 = vpack.c.bf16 %v421, %v420
        %v446 = vpack.c.bf16 %v423, %v422
        %v447 = vpack.c.bf16 %v425, %v424
        %v448 = vpack.c.bf16 %v427, %v426
        %v449 = vpack.c.bf16 %v429, %v428
        %v450 = vpack.c.bf16 %v431, %v430
        %v451 = vpack.c.bf16 %v433, %v432
        %v452 = vpack.c.bf16 %v435, %v434
        %v453 = vpack.c.bf16 %v437, %v436
        %v454 = vld [vmem:[%s2] sm:$0xf]
        %v455 = vld [vmem:[%s2 + $0x4] sm:$0xf]
        %v456 = vld [vmem:[%s2 + $0x8] sm:$0xf]
        %v457 = vld [vmem:[%s2 + $0xc] sm:$0xf]
        %v458 = vld [vmem:[%s3] sm:$0xf]
        %v459 = vld [vmem:[%s3 + $0x4] sm:$0xf]
        %v460 = vld [vmem:[%s3 + $0x8] sm:$0xf]
        %v461 = vld [vmem:[%s3 + $0xc] sm:$0xf]
        %v466 = vunpack.c.l.b16 %v458
        %v467 = vunpack.c.l.b16 %v459
        %v468 = vunpack.c.l.b16 %v460
        %v469 = vunpack.c.l.b16 %v461
        %v470 = vpack.c.b16 %v467, %v466
        %v471 = vpack.c.b16 %v469, %v468
        %vm474 = vcmask 261120
        %v476 = vsel %vm474, %v438, 0
        %v479 = vsel %vm474, %v439, 0
        %v482 = vsel %vm474, %v440, 0
        %v485 = vsel %vm474, %v441, 0
        %v488 = vsel %vm474, %v442, 0
        %v491 = vsel %vm474, %v443, 0
        %v494 = vsel %vm474, %v444, 0
        %v497 = vsel %vm474, %v445, 0
        %v500 = vsel %vm474, %v446, 0
        %v503 = vsel %vm474, %v447, 0
        %v506 = vsel %vm474, %v448, 0
        %v509 = vsel %vm474, %v449, 0
        %v512 = vsel %vm474, %v450, 0
        %v515 = vsel %vm474, %v451, 0
        %v518 = vsel %vm474, %v452, 0
        %v521 = vsel %vm474, %v453, 0
        %523 = vmatprep.subr.bf16.mxu0 0
        %524 = vmatpush1.bf16.msra.mxu0 %v470
        %525 = vmatprep.subr.bf16.mxu0 0
        %526 = vmatpush1.bf16.msra.mxu0 %v471
        %527 = vmatprep.subr.bf16.mxu0 0
        %528 = vmatpush1.bf16.msra.mxu0 0
        %529 = vmatprep.subr.bf16.mxu0 0
        %530 = vmatpush1.bf16.msra.mxu0 0
        %531 = vmatprep.subr.bf16.mxu0 0
        %532 = vmatpush1.bf16.msra.mxu0 0
        %533 = vmatprep.subr.bf16.mxu0 0
        %534 = vmatpush1.bf16.msra.mxu0 0
        %535 = vmatprep.subr.bf16.mxu0 0
        %536 = vmatpush1.bf16.msra.mxu0 0
        %537 = vmatprep.subr.bf16.mxu0 0
        %538 = vmatpush1.bf16.msra.mxu0 0
        %539 = vmatprep.subr.bf16.mxu0 0
        %540 = vmatpush1.bf16.msra.mxu0 0
        %541 = vmatprep.subr.bf16.mxu0 0
        %542 = vmatpush1.bf16.msra.mxu0 0
        %543 = vmatprep.subr.bf16.mxu0 0
        %544 = vmatpush1.bf16.msra.mxu0 0
        %545 = vmatprep.subr.bf16.mxu0 0
        %546 = vmatpush1.bf16.msra.mxu0 0
        %547 = vmatprep.subr.bf16.mxu0 0
        %548 = vmatpush1.bf16.msra.mxu0 0
        %549 = vmatprep.subr.bf16.mxu0 0
        %550 = vmatpush1.bf16.msra.mxu0 0
        %551 = vmatprep.subr.bf16.mxu0 0
        %552 = vmatpush1.bf16.msra.mxu0 0
        %553 = vmatprep.subr.bf16.mxu0 0
        %554 = vmatpush1.bf16.msra.mxu0 0
        %555 = vmatprep.mubr.bf16.mxu0 0
        %556 = vmatmul.mubr.bf16.gmra.mrb[0].mxu0 %v476
        %v557 = vpop.f32.mrb[0].mxu0
        %v558 = vadd.f32 0.0, %v557
        %v559 = vpop.f32.mrb[0].mxu0
        %v560 = vpop.f32.mrb[0].mxu0
        %v561 = vadd.f32 0.0, %v560
        %v562 = vpop.f32.mrb[0].mxu0
        %563 = vmatprep.mubr.bf16.mxu0 0
        %564 = vmatmul.mubr.bf16.gmra.mrb[0].mxu0 %v479
        %v565 = vpop.f32.mrb[0].mxu0
        %v566 = vadd.f32 0.0, %v565
        %v567 = vpop.f32.mrb[0].mxu0
        %v568 = vpop.f32.mrb[0].mxu0
        %v569 = vadd.f32 0.0, %v568
        %v570 = vpop.f32.mrb[0].mxu0
        %571 = vmatprep.mubr.bf16.mxu0 0
        %572 = vmatmul.mubr.bf16.gmra.mrb[0].mxu0 %v482
        %v573 = vpop.f32.mrb[0].mxu0
        %v574 = vadd.f32 0.0, %v573
        %v575 = vpop.f32.mrb[0].mxu0
        %v576 = vpop.f32.mrb[0].mxu0
        %v577 = vadd.f32 0.0, %v576
        %v578 = vpop.f32.mrb[0].mxu0
        %579 = vmatprep.mubr.bf16.mxu0 0
        %580 = vmatmul.mubr.bf16.gmra.mrb[0].mxu0 %v485
        %v581 = vpop.f32.mrb[0].mxu0
        %v582 = vadd.f32 0.0, %v581
        %v583 = vpop.f32.mrb[0].mxu0
        %v584 = vpop.f32.mrb[0].mxu0
        %v585 = vadd.f32 0.0, %v584
        %v586 = vpop.f32.mrb[0].mxu0
        %587 = vmatprep.mubr.bf16.mxu0 0
        %588 = vmatmul.mubr.bf16.gmra.mrb[0].mxu0 %v488
        %v589 = vpop.f32.mrb[0].mxu0
        %v590 = vadd.f32 0.0, %v589
        %v591 = vpop.f32.mrb[0].mxu0
        %v592 = vpop.f32.mrb[0].mxu0
        %v593 = vadd.f32 0.0, %v592
        %v594 = vpop.f32.mrb[0].mxu0
        %595 = vmatprep.mubr.bf16.mxu0 0
        %596 = vmatmul.mubr.bf16.gmra.mrb[0].mxu0 %v491
        %v597 = vpop.f32.mrb[0].mxu0
        %v598 = vadd.f32 0.0, %v597
        %v599 = vpop.f32.mrb[0].mxu0
        %v600 = vpop.f32.mrb[0].mxu0
        %v601 = vadd.f32 0.0, %v600
        %v602 = vpop.f32.mrb[0].mxu0
        %603 = vmatprep.mubr.bf16.mxu0 0
        %604 = vmatmul.mubr.bf16.gmra.mrb[0].mxu0 %v494
        %v605 = vpop.f32.mrb[0].mxu0
        %v606 = vadd.f32 0.0, %v605
        %v607 = vpop.f32.mrb[0].mxu0
        %v608 = vpop.f32.mrb[0].mxu0
        %v609 = vadd.f32 0.0, %v608
        %v610 = vpop.f32.mrb[0].mxu0
        %611 = vmatprep.mubr.bf16.mxu0 0
        %612 = vmatmul.mubr.bf16.gmra.mrb[0].mxu0 %v497
        %v613 = vpop.f32.mrb[0].mxu0
        %v614 = vadd.f32 0.0, %v613
        %v615 = vpop.f32.mrb[0].mxu0
        %v616 = vpop.f32.mrb[0].mxu0
        %v617 = vadd.f32 0.0, %v616
        %v618 = vpop.f32.mrb[0].mxu0
        %619 = vmatprep.mubr.bf16.mxu0 0
        %620 = vmatmul.mubr.bf16.gmra.mrb[0].mxu0 %v500
        %v621 = vpop.f32.mrb[0].mxu0
        %v622 = vadd.f32 0.0, %v621
        %v623 = vpop.f32.mrb[0].mxu0
        %v624 = vpop.f32.mrb[0].mxu0
        %v625 = vadd.f32 0.0, %v624
        %v626 = vpop.f32.mrb[0].mxu0
        %627 = vmatprep.mubr.bf16.mxu0 0
        %628 = vmatmul.mubr.bf16.gmra.mrb[0].mxu0 %v503
        %v629 = vpop.f32.mrb[0].mxu0
        %v630 = vadd.f32 0.0, %v629
        %v631 = vpop.f32.mrb[0].mxu0
        %v632 = vpop.f32.mrb[0].mxu0
        %v633 = vadd.f32 0.0, %v632
        %v634 = vpop.f32.mrb[0].mxu0
        %635 = vmatprep.mubr.bf16.mxu0 0
        %636 = vmatmul.mubr.bf16.gmra.mrb[0].mxu0 %v506
        %v637 = vpop.f32.mrb[0].mxu0
        %v638 = vadd.f32 0.0, %v637
        %v639 = vpop.f32.mrb[0].mxu0
        %v640 = vpop.f32.mrb[0].mxu0
        %v641 = vadd.f32 0.0, %v640
        %v642 = vpop.f32.mrb[0].mxu0
        %643 = vmatprep.mubr.bf16.mxu0 0
        %644 = vmatmul.mubr.bf16.gmra.mrb[0].mxu0 %v509
        %v645 = vpop.f32.mrb[0].mxu0
        %v646 = vadd.f32 0.0, %v645
        %v647 = vpop.f32.mrb[0].mxu0
        %v648 = vpop.f32.mrb[0].mxu0
        %v649 = vadd.f32 0.0, %v648
        %v650 = vpop.f32.mrb[0].mxu0
        %651 = vmatprep.mubr.bf16.mxu0 0
        %652 = vmatmul.mubr.bf16.gmra.mrb[0].mxu0 %v512
        %v653 = vpop.f32.mrb[0].mxu0
        %v654 = vadd.f32 0.0, %v653
        %v655 = vpop.f32.mrb[0].mxu0
        %v656 = vpop.f32.mrb[0].mxu0
        %v657 = vadd.f32 0.0, %v656
        %v658 = vpop.f32.mrb[0].mxu0
        %659 = vmatprep.mubr.bf16.mxu0 0
        %660 = vmatmul.mubr.bf16.gmra.mrb[0].mxu0 %v515
        %v661 = vpop.f32.mrb[0].mxu0
        %v662 = vadd.f32 0.0, %v661
        %v663 = vpop.f32.mrb[0].mxu0
        %v664 = vpop.f32.mrb[0].mxu0
        %v665 = vadd.f32 0.0, %v664
        %v666 = vpop.f32.mrb[0].mxu0
        %667 = vmatprep.mubr.bf16.mxu0 0
        %668 = vmatmul.mubr.bf16.gmra.mrb[0].mxu0 %v518
        %v669 = vpop.f32.mrb[0].mxu0
        %v670 = vadd.f32 0.0, %v669
        %v671 = vpop.f32.mrb[0].mxu0
        %v672 = vpop.f32.mrb[0].mxu0
        %v673 = vadd.f32 0.0, %v672
        %v674 = vpop.f32.mrb[0].mxu0
        %675 = vmatprep.mubr.bf16.mxu0 0
        %676 = vmatmul.mubr.bf16.gmra.mrb[0].mxu0 %v521
        %v677 = vpop.f32.mrb[0].mxu0
        %v678 = vadd.f32 0.0, %v677
        %v679 = vpop.f32.mrb[0].mxu0
        %v680 = vpop.f32.mrb[0].mxu0
        %v681 = vadd.f32 0.0, %v680
        %v682 = vpop.f32.mrb[0].mxu0
        %683 = vdwg.mxu0
        %v688 = vunpack.c.l.b16 %v454
        %v689 = vunpack.c.l.b16 %v455
        %v690 = vunpack.c.l.b16 %v456
        %v691 = vunpack.c.l.b16 %v457
        %v692 = vpack.c.b16 %v689, %v688
        %v693 = vpack.c.b16 %v691, %v690
        %v697 = vsel %vm474, %v390, 0
        %v700 = vsel %vm474, %v391, 0
        %v703 = vsel %vm474, %v392, 0
        %v706 = vsel %vm474, %v393, 0
        %v709 = vsel %vm474, %v394, 0
        %v712 = vsel %vm474, %v395, 0
        %v715 = vsel %vm474, %v396, 0
        %v718 = vsel %vm474, %v397, 0
        %v721 = vsel %vm474, %v398, 0
        %v724 = vsel %vm474, %v399, 0
        %v727 = vsel %vm474, %v400, 0
        %v730 = vsel %vm474, %v401, 0
        %v733 = vsel %vm474, %v402, 0
        %v736 = vsel %vm474, %v403, 0
        %v739 = vsel %vm474, %v404, 0
        %v742 = vsel %vm474, %v405, 0
        %744 = vmatprep.subr.bf16.mxu0 0
        %745 = vmatpush1.bf16.msra.mxu0 %v692
        %746 = vmatprep.subr.bf16.mxu0 0
        %747 = vmatpush1.bf16.msra.mxu0 %v693
        %748 = vmatprep.subr.bf16.mxu0 0
        %749 = vmatpush1.bf16.msra.mxu0 0
        %750 = vmatprep.subr.bf16.mxu0 0
        %751 = vmatpush1.bf16.msra.mxu0 0
        %752 = vmatprep.subr.bf16.mxu0 0
        %753 = vmatpush1.bf16.msra.mxu0 0
        %754 = vmatprep.subr.bf16.mxu0 0
        %755 = vmatpush1.bf16.msra.mxu0 0
        %756 = vmatprep.subr.bf16.mxu0 0
        %757 = vmatpush1.bf16.msra.mxu0 0
        %758 = vmatprep.subr.bf16.mxu0 0
        %759 = vmatpush1.bf16.msra.mxu0 0
        %760 = vmatprep.subr.bf16.mxu0 0
        %761 = vmatpush1.bf16.msra.mxu0 0
        %762 = vmatprep.subr.bf16.mxu0 0
        %763 = vmatpush1.bf16.msra.mxu0 0
        %764 = vmatprep.subr.bf16.mxu0 0
        %765 = vmatpush1.bf16.msra.mxu0 0
        %766 = vmatprep.subr.bf16.mxu0 0
        %767 = vmatpush1.bf16.msra.mxu0 0
        %768 = vmatprep.subr.bf16.mxu0 0
        %769 = vmatpush1.bf16.msra.mxu0 0
        %770 = vmatprep.subr.bf16.mxu0 0
        %771 = vmatpush1.bf16.msra.mxu0 0
        %772 = vmatprep.subr.bf16.mxu0 0
        %773 = vmatpush1.bf16.msra.mxu0 0
        %774 = vmatprep.subr.bf16.mxu0 0
        %775 = vmatpush1.bf16.msra.mxu0 0
        %776 = vmatprep.mubr.bf16.mxu0 0
        %777 = vmatmul.mubr.bf16.gmra.mrb[0].mxu0 %v697
        %v778 = vpop.f32.mrb[0].mxu0
        %v779 = vadd.f32 %v558, %v778
        %v780 = vpop.f32.mrb[0].mxu0
        %v781 = vpop.f32.mrb[0].mxu0
        %v782 = vadd.f32 %v561, %v781
        %v783 = vpop.f32.mrb[0].mxu0
        %784 = vmatprep.mubr.bf16.mxu0 0
        %785 = vmatmul.mubr.bf16.gmra.mrb[0].mxu0 %v700
        %v786 = vpop.f32.mrb[0].mxu0
        %v787 = vadd.f32 %v566, %v786
        %v788 = vpop.f32.mrb[0].mxu0
        %v789 = vpop.f32.mrb[0].mxu0
        %v790 = vadd.f32 %v569, %v789
        %v791 = vpop.f32.mrb[0].mxu0
        %792 = vmatprep.mubr.bf16.mxu0 0
        %793 = vmatmul.mubr.bf16.gmra.mrb[0].mxu0 %v703
        %v794 = vpop.f32.mrb[0].mxu0
        %v795 = vadd.f32 %v574, %v794
        %v796 = vpop.f32.mrb[0].mxu0
        %v797 = vpop.f32.mrb[0].mxu0
        %v798 = vadd.f32 %v577, %v797
        %v799 = vpop.f32.mrb[0].mxu0
        %800 = vmatprep.mubr.bf16.mxu0 0
        %801 = vmatmul.mubr.bf16.gmra.mrb[0].mxu0 %v706
        %v802 = vpop.f32.mrb[0].mxu0
        %v803 = vadd.f32 %v582, %v802
        %v804 = vpop.f32.mrb[0].mxu0
        %v805 = vpop.f32.mrb[0].mxu0
        %v806 = vadd.f32 %v585, %v805
        %v807 = vpop.f32.mrb[0].mxu0
        %808 = vmatprep.mubr.bf16.mxu0 0
        %809 = vmatmul.mubr.bf16.gmra.mrb[0].mxu0 %v709
        %v810 = vpop.f32.mrb[0].mxu0
        %v811 = vadd.f32 %v590, %v810
        %v812 = vpop.f32.mrb[0].mxu0
        %v813 = vpop.f32.mrb[0].mxu0
        %v814 = vadd.f32 %v593, %v813
        %v815 = vpop.f32.mrb[0].mxu0
        %816 = vmatprep.mubr.bf16.mxu0 0
        %817 = vmatmul.mubr.bf16.gmra.mrb[0].mxu0 %v712
        %v818 = vpop.f32.mrb[0].mxu0
        %v819 = vadd.f32 %v598, %v818
        %v820 = vpop.f32.mrb[0].mxu0
        %v821 = vpop.f32.mrb[0].mxu0
        %v822 = vadd.f32 %v601, %v821
        %v823 = vpop.f32.mrb[0].mxu0
        %824 = vmatprep.mubr.bf16.mxu0 0
        %825 = vmatmul.mubr.bf16.gmra.mrb[0].mxu0 %v715
        %v826 = vpop.f32.mrb[0].mxu0
        %v827 = vadd.f32 %v606, %v826
        %v828 = vpop.f32.mrb[0].mxu0
        %v829 = vpop.f32.mrb[0].mxu0
        %v830 = vadd.f32 %v609, %v829
        %v831 = vpop.f32.mrb[0].mxu0
        %832 = vmatprep.mubr.bf16.mxu0 0
        %833 = vmatmul.mubr.bf16.gmra.mrb[0].mxu0 %v718
        %v834 = vpop.f32.mrb[0].mxu0
        %v835 = vadd.f32 %v614, %v834
        %v836 = vpop.f32.mrb[0].mxu0
        %v837 = vpop.f32.mrb[0].mxu0
        %v838 = vadd.f32 %v617, %v837
        %v839 = vpop.f32.mrb[0].mxu0
        %840 = vmatprep.mubr.bf16.mxu0 0
        %841 = vmatmul.mubr.bf16.gmra.mrb[0].mxu0 %v721
        %v842 = vpop.f32.mrb[0].mxu0
        %v843 = vadd.f32 %v622, %v842
        %v844 = vpop.f32.mrb[0].mxu0
        %v845 = vpop.f32.mrb[0].mxu0
        %v846 = vadd.f32 %v625, %v845
        %v847 = vpop.f32.mrb[0].mxu0
        %848 = vmatprep.mubr.bf16.mxu0 0
        %849 = vmatmul.mubr.bf16.gmra.mrb[0].mxu0 %v724
        %v850 = vpop.f32.mrb[0].mxu0
        %v851 = vadd.f32 %v630, %v850
        %v852 = vpop.f32.mrb[0].mxu0
        %v853 = vpop.f32.mrb[0].mxu0
        %v854 = vadd.f32 %v633, %v853
        %v855 = vpop.f32.mrb[0].mxu0
        %856 = vmatprep.mubr.bf16.mxu0 0
        %857 = vmatmul.mubr.bf16.gmra.mrb[0].mxu0 %v727
        %v858 = vpop.f32.mrb[0].mxu0
        %v859 = vadd.f32 %v638, %v858
        %v860 = vpop.f32.mrb[0].mxu0
        %v861 = vpop.f32.mrb[0].mxu0
        %v862 = vadd.f32 %v641, %v861
        %v863 = vpop.f32.mrb[0].mxu0
        %864 = vmatprep.mubr.bf16.mxu0 0
        %865 = vmatmul.mubr.bf16.gmra.mrb[0].mxu0 %v730
        %v866 = vpop.f32.mrb[0].mxu0
        %v867 = vadd.f32 %v646, %v866
        %v868 = vpop.f32.mrb[0].mxu0
        %v869 = vpop.f32.mrb[0].mxu0
        %v870 = vadd.f32 %v649, %v869
        %v871 = vpop.f32.mrb[0].mxu0
        %872 = vmatprep.mubr.bf16.mxu0 0
        %873 = vmatmul.mubr.bf16.gmra.mrb[0].mxu0 %v733
        %v874 = vpop.f32.mrb[0].mxu0
        %v875 = vadd.f32 %v654, %v874
        %v876 = vpop.f32.mrb[0].mxu0
        %v877 = vpop.f32.mrb[0].mxu0
        %v878 = vadd.f32 %v657, %v877
        %v879 = vpop.f32.mrb[0].mxu0
        %880 = vmatprep.mubr.bf16.mxu0 0
        %881 = vmatmul.mubr.bf16.gmra.mrb[0].mxu0 %v736
        %v882 = vpop.f32.mrb[0].mxu0
        %v883 = vadd.f32 %v662, %v882
        %v884 = vpop.f32.mrb[0].mxu0
        %v885 = vpop.f32.mrb[0].mxu0
        %v886 = vadd.f32 %v665, %v885
        %v887 = vpop.f32.mrb[0].mxu0
        %888 = vmatprep.mubr.bf16.mxu0 0
        %889 = vmatmul.mubr.bf16.gmra.mrb[0].mxu0 %v739
        %v890 = vpop.f32.mrb[0].mxu0
        %v891 = vadd.f32 %v670, %v890
        %v892 = vpop.f32.mrb[0].mxu0
        %v893 = vpop.f32.mrb[0].mxu0
        %v894 = vadd.f32 %v673, %v893
        %v895 = vpop.f32.mrb[0].mxu0
        %896 = vmatprep.mubr.bf16.mxu0 0
        %897 = vmatmul.mubr.bf16.gmra.mrb[0].mxu0 %v742
        %v898 = vpop.f32.mrb[0].mxu0
        %v899 = vadd.f32 %v678, %v898
        %v900 = vpop.f32.mrb[0].mxu0
        %v901 = vpop.f32.mrb[0].mxu0
        %v902 = vadd.f32 %v681, %v901
        %v903 = vpop.f32.mrb[0].mxu0
        %904 = vdwg.mxu0
        %v905 = vld [vmem:[%s4] sm:$0x1]
        %v907 = vlaneseq
        %v908 = vshrl.u32 %v907, 7
        %v909 = vsub.s32 0, %v908
        %v910 = vrot.slane %v905, %v909
        %v912 = vadd.f32 %v779, %v910
        %v913 = vadd.f32 %v782, %v910
        %v914 = vadd.f32 %v787, %v910
        %v915 = vadd.f32 %v790, %v910
        %v916 = vadd.f32 %v795, %v910
        %v917 = vadd.f32 %v798, %v910
        %v918 = vadd.f32 %v803, %v910
        %v919 = vadd.f32 %v806, %v910
        %v920 = vadd.f32 %v811, %v910
        %v921 = vadd.f32 %v814, %v910
        %v922 = vadd.f32 %v819, %v910
        %v923 = vadd.f32 %v822, %v910
        %v924 = vadd.f32 %v827, %v910
        %v925 = vadd.f32 %v830, %v910
        %v926 = vadd.f32 %v835, %v910
        %v927 = vadd.f32 %v838, %v910
        %v928 = vadd.f32 %v843, %v910
        %v929 = vadd.f32 %v846, %v910
        %v930 = vadd.f32 %v851, %v910
        %v931 = vadd.f32 %v854, %v910
        %v932 = vadd.f32 %v859, %v910
        %v933 = vadd.f32 %v862, %v910
        %v934 = vadd.f32 %v867, %v910
        %v935 = vadd.f32 %v870, %v910
        %v936 = vadd.f32 %v875, %v910
        %v937 = vadd.f32 %v878, %v910
        %v938 = vadd.f32 %v883, %v910
        %v939 = vadd.f32 %v886, %v910
        %v940 = vadd.f32 %v891, %v910
        %v941 = vadd.f32 %v894, %v910
        %v942 = vadd.f32 %v899, %v910
        %v943 = vadd.f32 %v902, %v910
        %v944 = vmax.f32 %v912, 0.0
        %v945 = vmax.f32 %v913, 0.0
        %v946 = vmax.f32 %v914, 0.0
        %v947 = vmax.f32 %v915, 0.0
        %v948 = vmax.f32 %v916, 0.0
        %v949 = vmax.f32 %v917, 0.0
        %v950 = vmax.f32 %v918, 0.0
        %v951 = vmax.f32 %v919, 0.0
        %v952 = vmax.f32 %v920, 0.0
        %v953 = vmax.f32 %v921, 0.0
        %v954 = vmax.f32 %v922, 0.0
        %v955 = vmax.f32 %v923, 0.0
        %v956 = vmax.f32 %v924, 0.0
        %v957 = vmax.f32 %v925, 0.0
        %v958 = vmax.f32 %v926, 0.0
        %v959 = vmax.f32 %v927, 0.0
        %v960 = vmax.f32 %v928, 0.0
        %v961 = vmax.f32 %v929, 0.0
        %v962 = vmax.f32 %v930, 0.0
        %v963 = vmax.f32 %v931, 0.0
        %v964 = vmax.f32 %v932, 0.0
        %v965 = vmax.f32 %v933, 0.0
        %v966 = vmax.f32 %v934, 0.0
        %v967 = vmax.f32 %v935, 0.0
        %v968 = vmax.f32 %v936, 0.0
        %v969 = vmax.f32 %v937, 0.0
        %v970 = vmax.f32 %v938, 0.0
        %v971 = vmax.f32 %v939, 0.0
        %v972 = vmax.f32 %v940, 0.0
        %v973 = vmax.f32 %v941, 0.0
        %v974 = vmax.f32 %v942, 0.0
        %v975 = vmax.f32 %v943, 0.0
        %v976 = vpack.c.bf16 %v945, %v944
        %v977 = vpack.c.bf16 %v947, %v946
        %v978 = vpack.c.bf16 %v949, %v948
        %v979 = vpack.c.bf16 %v951, %v950
        %v980 = vpack.c.bf16 %v953, %v952
        %v981 = vpack.c.bf16 %v955, %v954
        %v982 = vpack.c.bf16 %v957, %v956
        %v983 = vpack.c.bf16 %v959, %v958
        %v984 = vpack.c.bf16 %v961, %v960
        %v985 = vpack.c.bf16 %v963, %v962
        %v986 = vpack.c.bf16 %v965, %v964
        %v987 = vpack.c.bf16 %v967, %v966
        %v988 = vpack.c.bf16 %v969, %v968
        %v989 = vpack.c.bf16 %v971, %v970
        %v990 = vpack.c.bf16 %v973, %v972
        %v991 = vpack.c.bf16 %v975, %v974
        %v992 = vld [vmem:[%s5] sm:$0xf]
        %v993 = vld [vmem:[%s5 + $0x4] sm:$0xf]
        %v994 = vld [vmem:[%s5 + $0x8] sm:$0xf]
        %v995 = vld [vmem:[%s5 + $0xc] sm:$0xf]
        %v996 = vld [vmem:[%s5 + $0x10] sm:$0xf]
        %v997 = vld [vmem:[%s5 + $0x14] sm:$0xf]
        %v998 = vld [vmem:[%s5 + $0x18] sm:$0xf]
        %v999 = vld [vmem:[%s5 + $0x1c] sm:$0xf]
        %v1000 = vld [vmem:[%s6] sm:$0x1]
        %v1002 = vlaneseq
        %v1003 = vshrl.u32 %v1002, 7
        %v1004 = vsub.s32 0, %v1003
        %v1005 = vrot.slane %v1000, %v1004
        %v1015 = vunpack.c.l.b16 %v992
        %v1016 = vunpack.c.l.b16 %v993
        %v1017 = vunpack.c.l.b16 %v994
        %v1018 = vunpack.c.l.b16 %v995
        %v1019 = vunpack.c.l.b16 %v996
        %v1020 = vunpack.c.l.b16 %v997
        %v1021 = vunpack.c.l.b16 %v998
        %v1022 = vunpack.c.l.b16 %v999
        %v1023 = vpack.c.b16 %v1016, %v1015
        %v1024 = vpack.c.b16 %v1018, %v1017
        %v1025 = vpack.c.b16 %v1020, %v1019
        %v1026 = vpack.c.b16 %v1022, %v1021
        %vm1031 = vcmask 523264
        %v1033 = vsel %vm1031, %v976, 0
        %v1036 = vsel %vm1031, %v977, 0
        %v1039 = vsel %vm1031, %v978, 0
        %v1042 = vsel %vm1031, %v979, 0
        %v1045 = vsel %vm1031, %v980, 0
        %v1048 = vsel %vm1031, %v981, 0
        %v1051 = vsel %vm1031, %v982, 0
        %v1054 = vsel %vm1031, %v983, 0
        %v1057 = vsel %vm1031, %v984, 0
        %v1060 = vsel %vm1031, %v985, 0
        %v1063 = vsel %vm1031, %v986, 0
        %v1066 = vsel %vm1031, %v987, 0
        %v1069 = vsel %vm1031, %v988, 0
        %v1072 = vsel %vm1031, %v989, 0
        %v1075 = vsel %vm1031, %v990, 0
        %v1078 = vsel %vm1031, %v991, 0
        %1080 = vmatprep.subr.bf16.mxu0 0
        %1081 = vmatpush1.bf16.msra.mxu0 %v1023
        %1082 = vmatprep.subr.bf16.mxu0 0
        %1083 = vmatpush1.bf16.msra.mxu0 %v1024
        %1084 = vmatprep.subr.bf16.mxu0 0
        %1085 = vmatpush1.bf16.msra.mxu0 %v1025
        %1086 = vmatprep.subr.bf16.mxu0 0
        %1087 = vmatpush1.bf16.msra.mxu0 %v1026
        %1088 = vmatprep.subr.bf16.mxu0 0
        %1089 = vmatpush1.bf16.msra.mxu0 0
        %1090 = vmatprep.subr.bf16.mxu0 0
        %1091 = vmatpush1.bf16.msra.mxu0 0
        %1092 = vmatprep.subr.bf16.mxu0 0
        %1093 = vmatpush1.bf16.msra.mxu0 0
        %1094 = vmatprep.subr.bf16.mxu0 0
        %1095 = vmatpush1.bf16.msra.mxu0 0
        %1096 = vmatprep.subr.bf16.mxu0 0
        %1097 = vmatpush1.bf16.msra.mxu0 0
        %1098 = vmatprep.subr.bf16.mxu0 0
        %1099 = vmatpush1.bf16.msra.mxu0 0
        %1100 = vmatprep.subr.bf16.mxu0 0
        %1101 = vmatpush1.bf16.msra.mxu0 0
        %1102 = vmatprep.subr.bf16.mxu0 0
        %1103 = vmatpush1.bf16.msra.mxu0 0
        %1104 = vmatprep.subr.bf16.mxu0 0
        %1105 = vmatpush1.bf16.msra.mxu0 0
        %1106 = vmatprep.subr.bf16.mxu0 0
        %1107 = vmatpush1.bf16.msra.mxu0 0
        %1108 = vmatprep.subr.bf16.mxu0 0
        %1109 = vmatpush1.bf16.msra.mxu0 0
        %1110 = vmatprep.subr.bf16.mxu0 0
        %1111 = vmatpush1.bf16.msra.mxu0 0
        %1112 = vmatprep.mubr.bf16.mxu0 0
        %1113 = vmatmul.mubr.bf16.gmra.mrb[0].mxu0 %v1033
        %v1114 = vpop.f32.mrb[0].mxu0
        %v1115 = vadd.f32 %v1005, %v1114
        %v1116 = vpop.f32.mrb[0].mxu0
        %v1117 = vpop.f32.mrb[0].mxu0
        %v1118 = vadd.f32 %v1005, %v1117
        %v1119 = vpop.f32.mrb[0].mxu0
        %1120 = vmatprep.mubr.bf16.mxu0 0
        %1121 = vmatmul.mubr.bf16.gmra.mrb[0].mxu0 %v1036
        %v1122 = vpop.f32.mrb[0].mxu0
        %v1123 = vadd.f32 %v1005, %v1122
        %v1124 = vpop.f32.mrb[0].mxu0
        %v1125 = vpop.f32.mrb[0].mxu0
        %v1126 = vadd.f32 %v1005, %v1125
        %v1127 = vpop.f32.mrb[0].mxu0
        %1128 = vmatprep.mubr.bf16.mxu0 0
        %1129 = vmatmul.mubr.bf16.gmra.mrb[0].mxu0 %v1039
        %v1130 = vpop.f32.mrb[0].mxu0
        %v1131 = vadd.f32 %v1005, %v1130
        %v1132 = vpop.f32.mrb[0].mxu0
        %v1133 = vpop.f32.mrb[0].mxu0
        %v1134 = vadd.f32 %v1005, %v1133
        %v1135 = vpop.f32.mrb[0].mxu0
        %1136 = vmatprep.mubr.bf16.mxu0 0
        %1137 = vmatmul.mubr.bf16.gmra.mrb[0].mxu0 %v1042
        %v1138 = vpop.f32.mrb[0].mxu0
        %v1139 = vadd.f32 %v1005, %v1138
        %v1140 = vpop.f32.mrb[0].mxu0
        %v1141 = vpop.f32.mrb[0].mxu0
        %v1142 = vadd.f32 %v1005, %v1141
        %v1143 = vpop.f32.mrb[0].mxu0
        %1144 = vmatprep.mubr.bf16.mxu0 0
        %1145 = vmatmul.mubr.bf16.gmra.mrb[0].mxu0 %v1045
        %v1146 = vpop.f32.mrb[0].mxu0
        %v1147 = vadd.f32 %v1005, %v1146
        %v1148 = vpop.f32.mrb[0].mxu0
        %v1149 = vpop.f32.mrb[0].mxu0
        %v1150 = vadd.f32 %v1005, %v1149
        %v1151 = vpop.f32.mrb[0].mxu0
        %1152 = vmatprep.mubr.bf16.mxu0 0
        %1153 = vmatmul.mubr.bf16.gmra.mrb[0].mxu0 %v1048
        %v1154 = vpop.f32.mrb[0].mxu0
        %v1155 = vadd.f32 %v1005, %v1154
        %v1156 = vpop.f32.mrb[0].mxu0
        %v1157 = vpop.f32.mrb[0].mxu0
        %v1158 = vadd.f32 %v1005, %v1157
        %v1159 = vpop.f32.mrb[0].mxu0
        %1160 = vmatprep.mubr.bf16.mxu0 0
        %1161 = vmatmul.mubr.bf16.gmra.mrb[0].mxu0 %v1051
        %v1162 = vpop.f32.mrb[0].mxu0
        %v1163 = vadd.f32 %v1005, %v1162
        %v1164 = vpop.f32.mrb[0].mxu0
        %v1165 = vpop.f32.mrb[0].mxu0
        %v1166 = vadd.f32 %v1005, %v1165
        %v1167 = vpop.f32.mrb[0].mxu0
        %1168 = vmatprep.mubr.bf16.mxu0 0
        %1169 = vmatmul.mubr.bf16.gmra.mrb[0].mxu0 %v1054
        %v1170 = vpop.f32.mrb[0].mxu0
        %v1171 = vadd.f32 %v1005, %v1170
        %v1172 = vpop.f32.mrb[0].mxu0
        %v1173 = vpop.f32.mrb[0].mxu0
        %v1174 = vadd.f32 %v1005, %v1173
        %v1175 = vpop.f32.mrb[0].mxu0
        %1176 = vmatprep.mubr.bf16.mxu0 0
        %1177 = vmatmul.mubr.bf16.gmra.mrb[0].mxu0 %v1057
        %v1178 = vpop.f32.mrb[0].mxu0
        %v1179 = vadd.f32 %v1005, %v1178
        %v1180 = vpop.f32.mrb[0].mxu0
        %v1181 = vpop.f32.mrb[0].mxu0
        %v1182 = vadd.f32 %v1005, %v1181
        %v1183 = vpop.f32.mrb[0].mxu0
        %1184 = vmatprep.mubr.bf16.mxu0 0
        %1185 = vmatmul.mubr.bf16.gmra.mrb[0].mxu0 %v1060
        %v1186 = vpop.f32.mrb[0].mxu0
        %v1187 = vadd.f32 %v1005, %v1186
        %v1188 = vpop.f32.mrb[0].mxu0
        %v1189 = vpop.f32.mrb[0].mxu0
        %v1190 = vadd.f32 %v1005, %v1189
        %v1191 = vpop.f32.mrb[0].mxu0
        %1192 = vmatprep.mubr.bf16.mxu0 0
        %1193 = vmatmul.mubr.bf16.gmra.mrb[0].mxu0 %v1063
        %v1194 = vpop.f32.mrb[0].mxu0
        %v1195 = vadd.f32 %v1005, %v1194
        %v1196 = vpop.f32.mrb[0].mxu0
        %v1197 = vpop.f32.mrb[0].mxu0
        %v1198 = vadd.f32 %v1005, %v1197
        %v1199 = vpop.f32.mrb[0].mxu0
        %1200 = vmatprep.mubr.bf16.mxu0 0
        %1201 = vmatmul.mubr.bf16.gmra.mrb[0].mxu0 %v1066
        %v1202 = vpop.f32.mrb[0].mxu0
        %v1203 = vadd.f32 %v1005, %v1202
        %v1204 = vpop.f32.mrb[0].mxu0
        %v1205 = vpop.f32.mrb[0].mxu0
        %v1206 = vadd.f32 %v1005, %v1205
        %v1207 = vpop.f32.mrb[0].mxu0
        %1208 = vmatprep.mubr.bf16.mxu0 0
        %1209 = vmatmul.mubr.bf16.gmra.mrb[0].mxu0 %v1069
        %v1210 = vpop.f32.mrb[0].mxu0
        %v1211 = vadd.f32 %v1005, %v1210
        %v1212 = vpop.f32.mrb[0].mxu0
        %v1213 = vpop.f32.mrb[0].mxu0
        %v1214 = vadd.f32 %v1005, %v1213
        %v1215 = vpop.f32.mrb[0].mxu0
        %1216 = vmatprep.mubr.bf16.mxu0 0
        %1217 = vmatmul.mubr.bf16.gmra.mrb[0].mxu0 %v1072
        %v1218 = vpop.f32.mrb[0].mxu0
        %v1219 = vadd.f32 %v1005, %v1218
        %v1220 = vpop.f32.mrb[0].mxu0
        %v1221 = vpop.f32.mrb[0].mxu0
        %v1222 = vadd.f32 %v1005, %v1221
        %v1223 = vpop.f32.mrb[0].mxu0
        %1224 = vmatprep.mubr.bf16.mxu0 0
        %1225 = vmatmul.mubr.bf16.gmra.mrb[0].mxu0 %v1075
        %v1226 = vpop.f32.mrb[0].mxu0
        %v1227 = vadd.f32 %v1005, %v1226
        %v1228 = vpop.f32.mrb[0].mxu0
        %v1229 = vpop.f32.mrb[0].mxu0
        %v1230 = vadd.f32 %v1005, %v1229
        %v1231 = vpop.f32.mrb[0].mxu0
        %1232 = vmatprep.mubr.bf16.mxu0 0
        %1233 = vmatmul.mubr.bf16.gmra.mrb[0].mxu0 %v1078
        %v1234 = vpop.f32.mrb[0].mxu0
        %v1235 = vadd.f32 %v1005, %v1234
        %v1236 = vpop.f32.mrb[0].mxu0
        %v1237 = vpop.f32.mrb[0].mxu0
        %v1238 = vadd.f32 %v1005, %v1237
        %v1239 = vpop.f32.mrb[0].mxu0
        %1240 = vdwg.mxu0
        %v1241 = vmax.f32 %v1115, 0.0
        %v1242 = vmax.f32 %v1118, 0.0
        %v1243 = vmax.f32 %v1123, 0.0
        %v1244 = vmax.f32 %v1126, 0.0
        %v1245 = vmax.f32 %v1131, 0.0
        %v1246 = vmax.f32 %v1134, 0.0
        %v1247 = vmax.f32 %v1139, 0.0
        %v1248 = vmax.f32 %v1142, 0.0
        %v1249 = vmax.f32 %v1147, 0.0
        %v1250 = vmax.f32 %v1150, 0.0
        %v1251 = vmax.f32 %v1155, 0.0
        %v1252 = vmax.f32 %v1158, 0.0
        %v1253 = vmax.f32 %v1163, 0.0
        %v1254 = vmax.f32 %v1166, 0.0
        %v1255 = vmax.f32 %v1171, 0.0
        %v1256 = vmax.f32 %v1174, 0.0
        %v1257 = vmax.f32 %v1179, 0.0
        %v1258 = vmax.f32 %v1182, 0.0
        %v1259 = vmax.f32 %v1187, 0.0
        %v1260 = vmax.f32 %v1190, 0.0
        %v1261 = vmax.f32 %v1195, 0.0
        %v1262 = vmax.f32 %v1198, 0.0
        %v1263 = vmax.f32 %v1203, 0.0
        %v1264 = vmax.f32 %v1206, 0.0
        %v1265 = vmax.f32 %v1211, 0.0
        %v1266 = vmax.f32 %v1214, 0.0
        %v1267 = vmax.f32 %v1219, 0.0
        %v1268 = vmax.f32 %v1222, 0.0
        %v1269 = vmax.f32 %v1227, 0.0
        %v1270 = vmax.f32 %v1230, 0.0
        %v1271 = vmax.f32 %v1235, 0.0
        %v1272 = vmax.f32 %v1238, 0.0
        %v1273 = vld [vmem:[%s7] sm:$0x1]
        %v1275 = vlaneseq
        %v1276 = vshrl.u32 %v1275, 7
        %v1277 = vsub.s32 0, %v1276
        %v1278 = vrot.slane %v1273, %v1277
        %v1280 = vmul.f32 %v1241, %v1278
        %v1281 = vmul.f32 %v1242, %v1278
        %v1282 = vmul.f32 %v1243, %v1278
        %v1283 = vmul.f32 %v1244, %v1278
        %v1284 = vmul.f32 %v1245, %v1278
        %v1285 = vmul.f32 %v1246, %v1278
        %v1286 = vmul.f32 %v1247, %v1278
        %v1287 = vmul.f32 %v1248, %v1278
        %v1288 = vmul.f32 %v1249, %v1278
        %v1289 = vmul.f32 %v1250, %v1278
        %v1290 = vmul.f32 %v1251, %v1278
        %v1291 = vmul.f32 %v1252, %v1278
        %v1292 = vmul.f32 %v1253, %v1278
        %v1293 = vmul.f32 %v1254, %v1278
        %v1294 = vmul.f32 %v1255, %v1278
        %v1295 = vmul.f32 %v1256, %v1278
        %v1296 = vmul.f32 %v1257, %v1278
        %v1297 = vmul.f32 %v1258, %v1278
        %v1298 = vmul.f32 %v1259, %v1278
        %v1299 = vmul.f32 %v1260, %v1278
        %v1300 = vmul.f32 %v1261, %v1278
        %v1301 = vmul.f32 %v1262, %v1278
        %v1302 = vmul.f32 %v1263, %v1278
        %v1303 = vmul.f32 %v1264, %v1278
        %v1304 = vmul.f32 %v1265, %v1278
        %v1305 = vmul.f32 %v1266, %v1278
        %v1306 = vmul.f32 %v1267, %v1278
        %v1307 = vmul.f32 %v1268, %v1278
        %v1308 = vmul.f32 %v1269, %v1278
        %v1309 = vmul.f32 %v1270, %v1278
        %v1310 = vmul.f32 %v1271, %v1278
        %v1311 = vmul.f32 %v1272, %v1278
        %1312 = vadd.xlane.f32.xlu0 %v1280
        %v1313 = vpop.xlane.xlu0 %1312
        %1314 = vadd.xlane.f32.xlu0 %v1281
        %v1315 = vpop.xlane.xlu0 %1314
        %1316 = vadd.xlane.f32.xlu0 %v1282
        %v1317 = vpop.xlane.xlu0 %1316
        %1318 = vadd.xlane.f32.xlu0 %v1283
        %v1319 = vpop.xlane.xlu0 %1318
        %1320 = vadd.xlane.f32.xlu0 %v1284
        %v1321 = vpop.xlane.xlu0 %1320
        %1322 = vadd.xlane.f32.xlu0 %v1285
        %v1323 = vpop.xlane.xlu0 %1322
        %1324 = vadd.xlane.f32.xlu0 %v1286
        %v1325 = vpop.xlane.xlu0 %1324
        %1326 = vadd.xlane.f32.xlu0 %v1287
        %v1327 = vpop.xlane.xlu0 %1326
        %1328 = vadd.xlane.f32.xlu0 %v1288
        %v1329 = vpop.xlane.xlu0 %1328
        %1330 = vadd.xlane.f32.xlu0 %v1289
        %v1331 = vpop.xlane.xlu0 %1330
        %1332 = vadd.xlane.f32.xlu0 %v1290
        %v1333 = vpop.xlane.xlu0 %1332
        %1334 = vadd.xlane.f32.xlu0 %v1291
        %v1335 = vpop.xlane.xlu0 %1334
        %1336 = vadd.xlane.f32.xlu0 %v1292
        %v1337 = vpop.xlane.xlu0 %1336
        %1338 = vadd.xlane.f32.xlu0 %v1293
        %v1339 = vpop.xlane.xlu0 %1338
        %1340 = vadd.xlane.f32.xlu0 %v1294
        %v1341 = vpop.xlane.xlu0 %1340
        %1342 = vadd.xlane.f32.xlu0 %v1295
        %v1343 = vpop.xlane.xlu0 %1342
        %1344 = vadd.xlane.f32.xlu0 %v1296
        %v1345 = vpop.xlane.xlu0 %1344
        %1346 = vadd.xlane.f32.xlu0 %v1297
        %v1347 = vpop.xlane.xlu0 %1346
        %1348 = vadd.xlane.f32.xlu0 %v1298
        %v1349 = vpop.xlane.xlu0 %1348
        %1350 = vadd.xlane.f32.xlu0 %v1299
        %v1351 = vpop.xlane.xlu0 %1350
        %1352 = vadd.xlane.f32.xlu0 %v1300
        %v1353 = vpop.xlane.xlu0 %1352
        %1354 = vadd.xlane.f32.xlu0 %v1301
        %v1355 = vpop.xlane.xlu0 %1354
        %1356 = vadd.xlane.f32.xlu0 %v1302
        %v1357 = vpop.xlane.xlu0 %1356
        %1358 = vadd.xlane.f32.xlu0 %v1303
        %v1359 = vpop.xlane.xlu0 %1358
        %1360 = vadd.xlane.f32.xlu0 %v1304
        %v1361 = vpop.xlane.xlu0 %1360
        %1362 = vadd.xlane.f32.xlu0 %v1305
        %v1363 = vpop.xlane.xlu0 %1362
        %1364 = vadd.xlane.f32.xlu0 %v1306
        %v1365 = vpop.xlane.xlu0 %1364
        %1366 = vadd.xlane.f32.xlu0 %v1307
        %v1367 = vpop.xlane.xlu0 %1366
        %1368 = vadd.xlane.f32.xlu0 %v1308
        %v1369 = vpop.xlane.xlu0 %1368
        %1370 = vadd.xlane.f32.xlu0 %v1309
        %v1371 = vpop.xlane.xlu0 %1370
        %1372 = vadd.xlane.f32.xlu0 %v1310
        %v1373 = vpop.xlane.xlu0 %1372
        %1374 = vadd.xlane.f32.xlu0 %v1311
        %v1375 = vpop.xlane.xlu0 %1374
        %s1376 = sld [smem:[#allocation2]]
        %v1377 = vstv %s1376
        %v1378 = vadd.f32 %v1313, %v1377
        %v1379 = vadd.f32 %v1315, %v1377
        %v1380 = vadd.f32 %v1317, %v1377
        %v1381 = vadd.f32 %v1319, %v1377
        %v1382 = vadd.f32 %v1321, %v1377
        %v1383 = vadd.f32 %v1323, %v1377
        %v1384 = vadd.f32 %v1325, %v1377
        %v1385 = vadd.f32 %v1327, %v1377
        %v1386 = vadd.f32 %v1329, %v1377
        %v1387 = vadd.f32 %v1331, %v1377
        %v1388 = vadd.f32 %v1333, %v1377
        %v1389 = vadd.f32 %v1335, %v1377
        %v1390 = vadd.f32 %v1337, %v1377
        %v1391 = vadd.f32 %v1339, %v1377
        %v1392 = vadd.f32 %v1341, %v1377
        %v1393 = vadd.f32 %v1343, %v1377
        %v1394 = vadd.f32 %v1345, %v1377
        %v1395 = vadd.f32 %v1347, %v1377
        %v1396 = vadd.f32 %v1349, %v1377
        %v1397 = vadd.f32 %v1351, %v1377
        %v1398 = vadd.f32 %v1353, %v1377
        %v1399 = vadd.f32 %v1355, %v1377
        %v1400 = vadd.f32 %v1357, %v1377
        %v1401 = vadd.f32 %v1359, %v1377
        %v1402 = vadd.f32 %v1361, %v1377
        %v1403 = vadd.f32 %v1363, %v1377
        %v1404 = vadd.f32 %v1365, %v1377
        %v1405 = vadd.f32 %v1367, %v1377
        %v1406 = vadd.f32 %v1369, %v1377
        %v1407 = vadd.f32 %v1371, %v1377
        %v1408 = vadd.f32 %v1373, %v1377
        %v1409 = vadd.f32 %v1375, %v1377
        %v1410 = vmul.f32 %v1378, 0.5
        %v1411 = vmul.f32 %v1379, 0.5
        %v1412 = vmul.f32 %v1380, 0.5
        %v1413 = vmul.f32 %v1381, 0.5
        %v1414 = vmul.f32 %v1382, 0.5
        %v1415 = vmul.f32 %v1383, 0.5
        %v1416 = vmul.f32 %v1384, 0.5
        %v1417 = vmul.f32 %v1385, 0.5
        %v1418 = vmul.f32 %v1386, 0.5
        %v1419 = vmul.f32 %v1387, 0.5
        %v1420 = vmul.f32 %v1388, 0.5
        %v1421 = vmul.f32 %v1389, 0.5
        %v1422 = vmul.f32 %v1390, 0.5
        %v1423 = vmul.f32 %v1391, 0.5
        %v1424 = vmul.f32 %v1392, 0.5
        %v1425 = vmul.f32 %v1393, 0.5
        %v1426 = vmul.f32 %v1394, 0.5
        %v1427 = vmul.f32 %v1395, 0.5
        %v1428 = vmul.f32 %v1396, 0.5
        %v1429 = vmul.f32 %v1397, 0.5
        %v1430 = vmul.f32 %v1398, 0.5
        %v1431 = vmul.f32 %v1399, 0.5
        %v1432 = vmul.f32 %v1400, 0.5
        %v1433 = vmul.f32 %v1401, 0.5
        %v1434 = vmul.f32 %v1402, 0.5
        %v1435 = vmul.f32 %v1403, 0.5
        %v1436 = vmul.f32 %v1404, 0.5
        %v1437 = vmul.f32 %v1405, 0.5
        %v1438 = vmul.f32 %v1406, 0.5
        %v1439 = vmul.f32 %v1407, 0.5
        %v1440 = vmul.f32 %v1408, 0.5
        %v1441 = vmul.f32 %v1409, 0.5
        %v1442 = vtanh.pop %v1410
        %v1443 = vtanh.pop %v1411
        %v1444 = vtanh.pop %v1412
        %v1445 = vtanh.pop %v1413
        %v1446 = vtanh.pop %v1414
        %v1447 = vtanh.pop %v1415
        %v1448 = vtanh.pop %v1416
        %v1449 = vtanh.pop %v1417
        %v1450 = vtanh.pop %v1418
        %v1451 = vtanh.pop %v1419
        %v1452 = vtanh.pop %v1420
        %v1453 = vtanh.pop %v1421
        %v1454 = vtanh.pop %v1422
        %v1455 = vtanh.pop %v1423
        %v1456 = vtanh.pop %v1424
        %v1457 = vtanh.pop %v1425
        %v1458 = vtanh.pop %v1426
        %v1459 = vtanh.pop %v1427
        %v1460 = vtanh.pop %v1428
        %v1461 = vtanh.pop %v1429
        %v1462 = vtanh.pop %v1430
        %v1463 = vtanh.pop %v1431
        %v1464 = vtanh.pop %v1432
        %v1465 = vtanh.pop %v1433
        %v1466 = vtanh.pop %v1434
        %v1467 = vtanh.pop %v1435
        %v1468 = vtanh.pop %v1436
        %v1469 = vtanh.pop %v1437
        %v1470 = vtanh.pop %v1438
        %v1471 = vtanh.pop %v1439
        %v1472 = vtanh.pop %v1440
        %v1473 = vtanh.pop %v1441
        %v1474 = vadd.f32 %v1442, 1.0
        %v1475 = vadd.f32 %v1443, 1.0
        %v1476 = vadd.f32 %v1444, 1.0
        %v1477 = vadd.f32 %v1445, 1.0
        %v1478 = vadd.f32 %v1446, 1.0
        %v1479 = vadd.f32 %v1447, 1.0
        %v1480 = vadd.f32 %v1448, 1.0
        %v1481 = vadd.f32 %v1449, 1.0
        %v1482 = vadd.f32 %v1450, 1.0
        %v1483 = vadd.f32 %v1451, 1.0
        %v1484 = vadd.f32 %v1452, 1.0
        %v1485 = vadd.f32 %v1453, 1.0
        %v1486 = vadd.f32 %v1454, 1.0
        %v1487 = vadd.f32 %v1455, 1.0
        %v1488 = vadd.f32 %v1456, 1.0
        %v1489 = vadd.f32 %v1457, 1.0
        %v1490 = vadd.f32 %v1458, 1.0
        %v1491 = vadd.f32 %v1459, 1.0
        %v1492 = vadd.f32 %v1460, 1.0
        %v1493 = vadd.f32 %v1461, 1.0
        %v1494 = vadd.f32 %v1462, 1.0
        %v1495 = vadd.f32 %v1463, 1.0
        %v1496 = vadd.f32 %v1464, 1.0
        %v1497 = vadd.f32 %v1465, 1.0
        %v1498 = vadd.f32 %v1466, 1.0
        %v1499 = vadd.f32 %v1467, 1.0
        %v1500 = vadd.f32 %v1468, 1.0
        %v1501 = vadd.f32 %v1469, 1.0
        %v1502 = vadd.f32 %v1470, 1.0
        %v1503 = vadd.f32 %v1471, 1.0
        %v1504 = vadd.f32 %v1472, 1.0
        %v1505 = vadd.f32 %v1473, 1.0
        %v1506 = vmul.f32 %v1474, 0.5
        %v1507 = vmul.f32 %v1475, 0.5
        %v1508 = vmul.f32 %v1476, 0.5
        %v1509 = vmul.f32 %v1477, 0.5
        %v1510 = vmul.f32 %v1478, 0.5
        %v1511 = vmul.f32 %v1479, 0.5
        %v1512 = vmul.f32 %v1480, 0.5
        %v1513 = vmul.f32 %v1481, 0.5
        %v1514 = vmul.f32 %v1482, 0.5
        %v1515 = vmul.f32 %v1483, 0.5
        %v1516 = vmul.f32 %v1484, 0.5
        %v1517 = vmul.f32 %v1485, 0.5
        %v1518 = vmul.f32 %v1486, 0.5
        %v1519 = vmul.f32 %v1487, 0.5
        %v1520 = vmul.f32 %v1488, 0.5
        %v1521 = vmul.f32 %v1489, 0.5
        %v1522 = vmul.f32 %v1490, 0.5
        %v1523 = vmul.f32 %v1491, 0.5
        %v1524 = vmul.f32 %v1492, 0.5
        %v1525 = vmul.f32 %v1493, 0.5
        %v1526 = vmul.f32 %v1494, 0.5
        %v1527 = vmul.f32 %v1495, 0.5
        %v1528 = vmul.f32 %v1496, 0.5
        %v1529 = vmul.f32 %v1497, 0.5
        %v1530 = vmul.f32 %v1498, 0.5
        %v1531 = vmul.f32 %v1499, 0.5
        %v1532 = vmul.f32 %v1500, 0.5
        %v1533 = vmul.f32 %v1501, 0.5
        %v1534 = vmul.f32 %v1502, 0.5
        %v1535 = vmul.f32 %v1503, 0.5
        %v1536 = vmul.f32 %v1504, 0.5
        %v1537 = vmul.f32 %v1505, 0.5
        %v1538 = vlaneseq
        %v1539 = vand.u32 %v1538, 127
        %vm1540 = vcmp.eq.s32.totalorder %v1539, 32
        %v1541 = vsel %vm1540, %v1506, %v1115
        %v1542 = vsel %vm1540, %v1507, %v1118
        %v1543 = vsel %vm1540, %v1508, %v1123
        %v1544 = vsel %vm1540, %v1509, %v1126
        %v1545 = vsel %vm1540, %v1510, %v1131
        %v1546 = vsel %vm1540, %v1511, %v1134
        %v1547 = vsel %vm1540, %v1512, %v1139
        %v1548 = vsel %vm1540, %v1513, %v1142
        %v1549 = vsel %vm1540, %v1514, %v1147
        %v1550 = vsel %vm1540, %v1515, %v1150
        %v1551 = vsel %vm1540, %v1516, %v1155
        %v1552 = vsel %vm1540, %v1517, %v1158
        %v1553 = vsel %vm1540, %v1518, %v1163
        %v1554 = vsel %vm1540, %v1519, %v1166
        %v1555 = vsel %vm1540, %v1520, %v1171
        %v1556 = vsel %vm1540, %v1521, %v1174
        %v1557 = vsel %vm1540, %v1522, %v1179
        %v1558 = vsel %vm1540, %v1523, %v1182
        %v1559 = vsel %vm1540, %v1524, %v1187
        %v1560 = vsel %vm1540, %v1525, %v1190
        %v1561 = vsel %vm1540, %v1526, %v1195
        %v1562 = vsel %vm1540, %v1527, %v1198
        %v1563 = vsel %vm1540, %v1528, %v1203
        %v1564 = vsel %vm1540, %v1529, %v1206
        %v1565 = vsel %vm1540, %v1530, %v1211
        %v1566 = vsel %vm1540, %v1531, %v1214
        %v1567 = vsel %vm1540, %v1532, %v1219
        %v1568 = vsel %vm1540, %v1533, %v1222
        %v1569 = vsel %vm1540, %v1534, %v1227
        %v1570 = vsel %vm1540, %v1535, %v1230
        %v1571 = vsel %vm1540, %v1536, %v1235
        %v1572 = vsel %vm1540, %v1537, %v1238
        %1573 = vst [vmem:[%s343] sm:$0xff] %v1541
        %1574 = vst [vmem:[%s343 + $0x8] sm:$0xff] %v1542
        %1575 = vst [vmem:[%s343 + $0x10] sm:$0xff] %v1543
        %1576 = vst [vmem:[%s343 + $0x18] sm:$0xff] %v1544
        %1577 = vst [vmem:[%s343 + $0x20] sm:$0xff] %v1545
        %1578 = vst [vmem:[%s343 + $0x28] sm:$0xff] %v1546
        %1579 = vst [vmem:[%s343 + $0x30] sm:$0xff] %v1547
        %1580 = vst [vmem:[%s343 + $0x38] sm:$0xff] %v1548
        %1581 = vst [vmem:[%s343 + $0x40] sm:$0xff] %v1549
        %1582 = vst [vmem:[%s343 + $0x48] sm:$0xff] %v1550
        %1583 = vst [vmem:[%s343 + $0x50] sm:$0xff] %v1551
        %1584 = vst [vmem:[%s343 + $0x58] sm:$0xff] %v1552
        %1585 = vst [vmem:[%s343 + $0x60] sm:$0xff] %v1553
        %1586 = vst [vmem:[%s343 + $0x68] sm:$0xff] %v1554
        %1587 = vst [vmem:[%s343 + $0x70] sm:$0xff] %v1555
        %1588 = vst [vmem:[%s343 + $0x78] sm:$0xff] %v1556
        %1589 = vst [vmem:[%s343 + $0x80] sm:$0xff] %v1557
        %1590 = vst [vmem:[%s343 + $0x88] sm:$0xff] %v1558
        %1591 = vst [vmem:[%s343 + $0x90] sm:$0xff] %v1559
        %1592 = vst [vmem:[%s343 + $0x98] sm:$0xff] %v1560
        %1593 = vst [vmem:[%s343 + $0xa0] sm:$0xff] %v1561
        %1594 = vst [vmem:[%s343 + $0xa8] sm:$0xff] %v1562
        %1595 = vst [vmem:[%s343 + $0xb0] sm:$0xff] %v1563
        %1596 = vst [vmem:[%s343 + $0xb8] sm:$0xff] %v1564
        %1597 = vst [vmem:[%s343 + $0xc0] sm:$0xff] %v1565
        %1598 = vst [vmem:[%s343 + $0xc8] sm:$0xff] %v1566
        %1599 = vst [vmem:[%s343 + $0xd0] sm:$0xff] %v1567
        %1600 = vst [vmem:[%s343 + $0xd8] sm:$0xff] %v1568
        %1601 = vst [vmem:[%s343 + $0xe0] sm:$0xff] %v1569
        %1602 = vst [vmem:[%s343 + $0xe8] sm:$0xff] %v1570
        %1603 = vst [vmem:[%s343 + $0xf0] sm:$0xff] %v1571
        %1604 = vst [vmem:[%s343 + $0xf8] sm:$0xff] %v1572
        %s1605 = sand.u32 %s231, 1
        %s1606 = scalar_lea.sflag [#allocation4], %s1605
        %s1607 = sand.u32 %s231, 1
        %s1608 = smul.addr %s1607, 256
        %s1609 = scalar_lea.vmem [#allocation3], %s1608
        // Predicated region
        $region57: #{tpu_custom_call.1} parent=55 // pred_check
          %p1610 = pneg %p241
        $region58: #{tpu_custom_call.1} parent=55 // pred_check_branch
          %1612 = sbr.rel (%p1610) target = $region60
        $region59: #{tpu_custom_call.1} parent=55 // pred_region
          %s1613 = smul.u32 32, %s24
          %s1615 = ssub.s32 4096, 4096
          %1616 = vsyncadd %s1606, %s1615
          %s1617 = smul.addr %s1613, 128
          %s1618 = scalar_lea.hbm %s9, %s1617
          %s1619 = sshll.u32 %s1609, 4
          %s1620 = int_to_ptr.vmem [resolvable:$true] %s1619
          %1625 = dma.vmem_to_hbm [thread:$0]  %s1620, 4096, %s1618, %s1606, 128, 128, 8
        $region60: #{tpu_custom_call.1} parent=55 // pred_fallthru
          _
      $region56: #{tpu_custom_call.1} parent=5 // pred_fallthru
        _
      %p1626 = scmp.le.s32.totalorder 2, %s19
      // Predicated region
      $region61: #{tpu_custom_call.1} parent=5 // pred_check
        %p1627 = pneg %p1626
      $region62: #{tpu_custom_call.1} parent=5 // pred_check_branch
        %1629 = sbr.rel (%p1627) target = $region64
      $region63: #{tpu_custom_call.1} parent=5 // pred_region
        %s1630 = ssub.s32 %s19, 2
        // Predicated region
        $region65: #{tpu_custom_call.1} parent=63 // pred_check
          %p1631 = pneg %p247
        $region66: #{tpu_custom_call.1} parent=63 // pred_check_branch
          %1633 = sbr.rel (%p1631) target = $region68
        $region67: #{tpu_custom_call.1} parent=63 // pred_region
          %s1634 = sand.u32 %s232, 1
          %s1635 = scalar_lea.sflag [#allocation4], %s1634
          %s1636 = sand.u32 %s232, 1
          %s1637 = smul.addr %s1636, 256
          %s1638 = scalar_lea.vmem [#allocation3], %s1637
          %1639 = dma.done %s1635, 4096
        $region68: #{tpu_custom_call.1} parent=63 // pred_fallthru
          _
      $region64: #{tpu_custom_call.1} parent=5 // pred_fallthru
        _
    $region6: #{tpu_custom_call.1} parent=1 // loop_footer
      %s23 = sadd.s32 1, %s19
    $region7: #{tpu_custom_call.1} parent=1 // loop_footer_branch
      %18 = sbr.rel target = $region3
    $region8: #{tpu_custom_call.1} parent=1 // loop_exit
      _
    %1640 = vsyncpa [#allocation4], 1
    %s1641 = scalar_lea.sflag [#allocation4], 1
    %1642 = vsyncpa %s1641, 1

</llo_original>
